<compile_context>
chip_gen: v6e
topology: v6e:2x2x1
jax: 0.10.0
libtpu: 0.0.40
codegen_flags: <defaults>
</compile_context>

<pallas_src>
import numpy as np

import jax
import jax.numpy as jnp
from jax.experimental import pallas as pl
from jax.experimental.pallas import tpu as pltpu  # noqa: F401  (kept for TPU-specific tuning hooks)

# ----------------------------- model config -------------------------------
B = 2          # batch
S = 8          # sequence length
D = 128        # hidden size
H = 4          # attention heads
DH = D // H    # head dim = 32
F = 256        # MLP intermediate size
V = 256        # vocab size
L = 2          # number of decoder layers
EPS = 1e-5
BS = B * S     # folded (batch*seq) rows = 16
HBS = H * BS   # folded (head*batch*seq) rows = 64


# ----------------------------- kernel helpers ------------------------------

def _layernorm(x, g, b):
    """One-pass LayerNorm. x: (R, D) f32, g/b: (1, D) f32 -> (R, D) f32."""
    mean = jnp.mean(x, axis=-1, keepdims=True)
    mean2 = jnp.mean(x * x, axis=-1, keepdims=True)
    var = mean2 - mean * mean
    return (x - mean) * jax.lax.rsqrt(var + EPS) * g + b


# ----------------------------- fused kernel --------------------------------

def _decoder_stack_kernel(
    x_ref,                                     # (BS, D)     f32 activations
    head_mask_ref,                             # (HBS, D)    f32 {0,1}: col head == row block head
    attn_bias_ref,                             # (HBS, BS)   f32 {0,-1e30}: batch-block causal
    ln1g_ref, ln1b_ref,                        # (L, 1, D)   f32
    wqkv_ref, bqkv_ref,                        # (L, D, 3D) bf16 / (L, 1, 3D) f32
    wo_ref, bo_ref,                            # (L, D, D)  bf16 / (L, 1, D)  f32
    ln2g_ref, ln2b_ref,                        # (L, 1, D)   f32
    wfc_ref, bfc_ref,                          # (L, D, F)  bf16 / (L, 1, F)  f32
    wpr_ref, bpr_ref,                          # (L, F, D)  bf16 / (L, 1, D)  f32
    lnfg_ref, lnfb_ref,                        # (1, D)      f32
    wlm_ref, blm_ref,                          # (D, V) bf16 / (1, V) f32
    o_ref,                                     # (BS, V)     f32 logits
):
    x = x_ref[...]                             # (BS, D) residual stream, f32
    head_mask = head_mask_ref[...]             # f32, hoisted out of the layer loop
    head_mask_bf = head_mask.astype(jnp.bfloat16)
    attn_bias = attn_bias_ref[...]             # f32 additive mask (stays f32)
    scale = 1.0 / (DH ** 0.5)

    for li in range(L):                        # static unroll over layers
        # ---------------- self-attention block (fully fused) ---------------
        h1 = _layernorm(x, ln1g_ref[li], ln1b_ref[li])
        qkv = jnp.dot(h1.astype(jnp.bfloat16), wqkv_ref[li],
                      preferred_element_type=jnp.float32) + bqkv_ref[li]   # (BS, 3D) f32
        qkv_bf = qkv.astype(jnp.bfloat16)      # single f32->bf16 cast for q/k/v
        q = qkv_bf[:, 0 * D:1 * D]             # (BS, D) bf16, 128-lane aligned slices
        k = qkv_bf[:, 1 * D:2 * D]
        v = qkv_bf[:, 2 * D:3 * D]

        # Fold heads onto the sublane axis with no transposes: row r = h*BS+i
        # of q_bd holds token i's query restricted to head h's columns, so one
        # NT matmul against k produces every head's (BS x BS) score block.
        q_bd = jnp.concatenate([q] * H, axis=0) * head_mask_bf             # (HBS, D) bf16
        s = jax.lax.dot_general(q_bd, k, (((1,), (1,)), ((), ())),
                                preferred_element_type=jnp.float32)        # (HBS, BS) f32
        s = s * scale + attn_bias
        s = s - jnp.max(s, axis=-1, keepdims=True)
        p = jnp.exp(s)
        # NOTE: approx reciprocal (EUP slot) deviates ~1e-3 rel. from exact
        # softmax; acceptable within the test tolerance below.
        p = p * pl.reciprocal(jnp.sum(p, axis=-1, keepdims=True), approx=True)

        # One PV matmul for all heads; row block h only keeps its own head's
        # output columns (head_mask) before collapsing the H row blocks.
        of = jnp.dot(p.astype(jnp.bfloat16), v,
                     preferred_element_type=jnp.float32)                   # (HBS, D) f32
        attn = of[0:BS] * head_mask[0:BS]
        for hh in range(1, H):
            attn = attn + of[hh * BS:(hh + 1) * BS] * head_mask[hh * BS:(hh + 1) * BS]

        # out-proj + residual fused into the same kernel
        x = x + jnp.dot(attn.astype(jnp.bfloat16), wo_ref[li],
                        preferred_element_type=jnp.float32) + bo_ref[li]

        # ---------------- MLP block (fully fused) ---------------------------
        h2 = _layernorm(x, ln2g_ref[li], ln2b_ref[li])
        ff = jnp.dot(h2.astype(jnp.bfloat16), wfc_ref[li],
                     preferred_element_type=jnp.float32) + bfc_ref[li]
        ff = jax.nn.gelu(ff, approximate=True)                 # HF gelu_new
        x = x + jnp.dot(ff.astype(jnp.bfloat16), wpr_ref[li],
                        preferred_element_type=jnp.float32) + bpr_ref[li]

    # --------------- final LayerNorm + lm_head fused ------------------------
    xf = _layernorm(x, lnfg_ref[...], lnfb_ref[...])
    logits = jnp.dot(xf.astype(jnp.bfloat16), wlm_ref[...],
                     preferred_element_type=jnp.float32) + blm_ref[...]
    o_ref[...] = logits.astype(o_ref.dtype)


# ----------------------------- mask construction ---------------------------

def _build_masks():
    """Compile-time constant masks for the folded (head, batch*seq) layout."""
    # head/column block mask: row r belongs to head r // BS; column c belongs
    # to head c // DH.
    r = np.arange(HBS)[:, None]
    c = np.arange(D)[None, :]
    head_mask = (c // DH == r // BS).astype(np.float32)                 # (HBS, D)

    # additive attention bias: query row r -> token i = r % BS (= b*S + s),
    # key column j = b'*S + s'; valid iff same batch and causal.
    i = np.arange(HBS)[:, None] % BS
    j = np.arange(BS)[None, :]
    ok = (j // S == i // S) & (j % S <= i % S)
    attn_bias = np.where(ok, 0.0, -1e30).astype(np.float32)             # (HBS, BS)
    return jnp.asarray(head_mask), jnp.asarray(attn_bias)


# ----------------------------- parameter init ------------------------------

def init_params(key):
    keys = jax.random.split(key, 3 + 4 * L + 1)

    def dense_w(k, fan_in, fan_out):
        return jax.random.normal(k, (fan_in, fan_out), jnp.float32) * (fan_in ** -0.5)

    wte = jax.random.normal(keys[0], (V, D), jnp.float32) * 0.02
    wpe = jax.random.normal(keys[1], (S, D), jnp.float32) * 0.02
    lm_head_w = jax.random.normal(keys[2], (D, V), jnp.float32) * 0.02

    w_qkv, w_o, w_fc, w_pr = [], [], [], []
    for li in range(L):
        base = 3 + 4 * li
        w_qkv.append(dense_w(keys[base + 0], D, 3 * D))
        w_o.append(dense_w(keys[base + 1], D, D))
        w_fc.append(dense_w(keys[base + 2], D, F))
        w_pr.append(dense_w(keys[base + 3], F, D))

    bk = jax.random.split(keys[-1], 5)
    params = {
        "wte": wte,
        "wpe": wpe,
        # per-layer params stacked along a leading L axis (kept resident in VMEM)
        "ln1_g": jnp.ones((L, 1, D), jnp.float32),
        "ln1_b": jnp.zeros((L, 1, D), jnp.float32),
        "ln2_g": jnp.ones((L, 1, D), jnp.float32),
        "ln2_b": jnp.zeros((L, 1, D), jnp.float32),
        "w_qkv": jnp.stack(w_qkv).astype(jnp.bfloat16),
        "b_qkv": jax.random.normal(bk[0], (L, 1, 3 * D), jnp.float32) * 0.01,
        "w_o": jnp.stack(w_o).astype(jnp.bfloat16),
        "b_o": jax.random.normal(bk[1], (L, 1, D), jnp.float32) * 0.01,
        "w_fc": jnp.stack(w_fc).astype(jnp.bfloat16),
        "b_fc": jax.random.normal(bk[2], (L, 1, F), jnp.float32) * 0.01,
        "w_pr": jnp.stack(w_pr).astype(jnp.bfloat16),
        "b_pr": jax.random.normal(bk[3], (L, 1, D), jnp.float32) * 0.01,
        "ln_f_g": jnp.ones((1, D), jnp.float32),
        "ln_f_b": jnp.zeros((1, D), jnp.float32),
        "lm_head_w": lm_head_w.astype(jnp.bfloat16),
        "lm_head_b": jax.random.normal(bk[4], (1, V), jnp.float32) * 0.01,
    }
    return params


# ----------------------------- forward pass --------------------------------

def forward(params, input_ids):
    """Equivalent of AutoModel.forward: decoder stack -> lm_head -> logits.

    input_ids: (B, S) int32  ->  logits: (B, S, V) float32
    """
    pos = jnp.arange(S, dtype=jnp.int32)
    # Embedding gather stays as cheap XLA glue outside the kernel.
    x = (params["wte"][input_ids] + params["wpe"][pos][None]).astype(jnp.float32)
    x = x.reshape(BS, D)                       # fold batch into sublanes

    head_mask, attn_bias = _build_masks()

    # Single invocation, no grid: every operand (< 2 MiB total) is placed
    # whole in VMEM, all L layers + final LN + lm_head run fused.
    logits = pl.pallas_call(
        _decoder_stack_kernel,
        out_shape=jax.ShapeDtypeStruct((BS, V), jnp.float32),
    )(x, head_mask, attn_bias,
      params["ln1_g"], params["ln1_b"], params["w_qkv"], params["b_qkv"],
      params["w_o"], params["b_o"], params["ln2_g"], params["ln2_b"],
      params["w_fc"], params["b_fc"], params["w_pr"], params["b_pr"],
      params["ln_f_g"], params["ln_f_b"], params["lm_head_w"], params["lm_head_b"])
    return logits.reshape(B, S, V)


# ----------------------------- pure-JAX reference ---------------------------

def _ref_layernorm(x, g, b):
    mean = jnp.mean(x, axis=-1, keepdims=True)
    var = jnp.mean(jnp.square(x - mean), axis=-1, keepdims=True)
    return (x - mean) * jax.lax.rsqrt(var + EPS) * g + b


def reference_forward(params, input_ids):
    pos = jnp.arange(S, dtype=jnp.int32)
    x = (params["wte"][input_ids] + params["wpe"][pos][None]).astype(jnp.float32)
    row = jax.lax.broadcasted_iota(jnp.int32, (S, S), 0)
    col = jax.lax.broadcasted_iota(jnp.int32, (S, S), 1)
    neg = jnp.where(col <= row, 0.0, -1e30).astype(jnp.float32)
    scale = 1.0 / (DH ** 0.5)
    for li in range(L):
        h = _ref_layernorm(x, params["ln1_g"][li], params["ln1_b"][li])
        qkv = jnp.einsum("bsd,de->bse", h.astype(jnp.bfloat16), params["w_qkv"][li],
                         preferred_element_type=jnp.float32) + params["b_qkv"][li]
        q, k, v = jnp.split(qkv, 3, axis=-1)
        q = q.reshape(B, S, H, DH).transpose(0, 2, 1, 3)
        k = k.reshape(B, S, H, DH).transpose(0, 2, 1, 3)
        v = v.reshape(B, S, H, DH).transpose(0, 2, 1, 3)
        s = jnp.einsum("bhqd,bhkd->bhqk", q.astype(jnp.bfloat16), k.astype(jnp.bfloat16),
                       preferred_element_type=jnp.float32) * scale + neg
        p = jax.nn.softmax(s, axis=-1)
        o = jnp.einsum("bhqk,bhkd->bhqd", p.astype(jnp.bfloat16), v.astype(jnp.bfloat16),
                       preferred_element_type=jnp.float32)
        attn = o.transpose(0, 2, 1, 3).reshape(B, S, D)
        x = x + jnp.einsum("bsd,de->bse", attn.astype(jnp.bfloat16), params["w_o"][li],
                           preferred_element_type=jnp.float32) + params["b_o"][li]
        h = _ref_layernorm(x, params["ln2_g"][li], params["ln2_b"][li])
        ff = jax.nn.gelu(
            jnp.einsum("bsd,df->bsf", h.astype(jnp.bfloat16), params["w_fc"][li],
                       preferred_element_type=jnp.float32) + params["b_fc"][li],
            approximate=True)
        x = x + jnp.einsum("bsf,fd->bsd", ff.astype(jnp.bfloat16), params["w_pr"][li],
                           preferred_element_type=jnp.float32) + params["b_pr"][li]
    xf = _ref_layernorm(x, params["ln_f_g"], params["ln_f_b"])
    logits = jnp.einsum("bsd,dv->bsv", xf.astype(jnp.bfloat16), params["lm_head_w"],
                        preferred_element_type=jnp.float32) + params["lm_head_b"]
    return logits


# ----------------------------- main -----------------------------------------

if __name__ == "__main__":
    key = jax.random.PRNGKey(0)
    k_param, k_ids = jax.random.split(key)
    params = init_params(k_param)
    input_ids = jax.random.randint(k_ids, (B, S), 0, V, dtype=jnp.int32)

    logits = jax.jit(forward)(params, input_ids)
    logits = jax.block_until_ready(logits)

    assert logits.shape == (B, S, V), logits.shape
    assert logits.dtype == jnp.float32
    assert bool(jnp.all(jnp.isfinite(logits)))

    # correctness check against a pure-JAX per-head reference (also verifies
    # no attention leakage across the folded batch / head blocks)
    ref = jax.block_until_ready(jax.jit(reference_forward)(params, input_ids))
    err = float(jnp.max(jnp.abs(logits - ref)))
    assert err < 1e-1, f"max abs error vs reference = {err}"

    print("KERNEL_OK")
</pallas_src>

<mosaic_0001>
module attributes {stable_mosaic.version = 11 : i64} {
  func.func @_decoder_stack_kernel(%arg0: memref<16x128xf32, #tpu.memory_space<vmem>>, %arg1: memref<64x128xf32, #tpu.memory_space<vmem>>, %arg2: memref<64x16xf32, #tpu.memory_space<vmem>>, %arg3: memref<2x1x128xf32, #tpu.memory_space<vmem>>, %arg4: memref<2x1x128xf32, #tpu.memory_space<vmem>>, %arg5: memref<2x128x384xbf16, #tpu.memory_space<vmem>>, %arg6: memref<2x1x384xf32, #tpu.memory_space<vmem>>, %arg7: memref<2x128x128xbf16, #tpu.memory_space<vmem>>, %arg8: memref<2x1x128xf32, #tpu.memory_space<vmem>>, %arg9: memref<2x1x128xf32, #tpu.memory_space<vmem>>, %arg10: memref<2x1x128xf32, #tpu.memory_space<vmem>>, %arg11: memref<2x128x256xbf16, #tpu.memory_space<vmem>>, %arg12: memref<2x1x256xf32, #tpu.memory_space<vmem>>, %arg13: memref<2x256x128xbf16, #tpu.memory_space<vmem>>, %arg14: memref<2x1x128xf32, #tpu.memory_space<vmem>>, %arg15: memref<1x128xf32, #tpu.memory_space<vmem>>, %arg16: memref<1x128xf32, #tpu.memory_space<vmem>>, %arg17: memref<128x256xbf16, #tpu.memory_space<vmem>>, %arg18: memref<1x256xf32, #tpu.memory_space<vmem>>, %arg19: memref<16x256xf32, #tpu.memory_space<vmem>>) attributes {dimension_semantics = [], scalar_prefetch = 0 : i64, scratch_operands = 0 : i64, tpu.core_type = #tpu.core_type<tc>} {
    %c0 = arith.constant 0 : index
    %c0_0 = arith.constant 0 : index
    %0 = vector.load %arg0[%c0, %c0_0] : memref<16x128xf32, #tpu.memory_space<vmem>>, vector<16x128xf32>
    %c0_1 = arith.constant 0 : index
    %c0_2 = arith.constant 0 : index
    %1 = vector.load %arg1[%c0_1, %c0_2] : memref<64x128xf32, #tpu.memory_space<vmem>>, vector<64x128xf32>
    %2 = arith.truncf %1 : vector<64x128xf32> to vector<64x128xbf16>
    %c0_3 = arith.constant 0 : index
    %c0_4 = arith.constant 0 : index
    %3 = vector.load %arg2[%c0_3, %c0_4] : memref<64x16xf32, #tpu.memory_space<vmem>>, vector<64x16xf32>
    %c0_5 = arith.constant 0 : index
    %c0_6 = arith.constant 0 : index
    %c0_7 = arith.constant 0 : index
    %4 = vector.load %arg3[%c0_5, %c0_6, %c0_7] : memref<2x1x128xf32, #tpu.memory_space<vmem>>, vector<1x1x128xf32>
    %5 = vector.shape_cast %4 : vector<1x1x128xf32> to vector<1x128xf32>
    %c0_8 = arith.constant 0 : index
    %c0_9 = arith.constant 0 : index
    %c0_10 = arith.constant 0 : index
    %6 = vector.load %arg4[%c0_8, %c0_9, %c0_10] : memref<2x1x128xf32, #tpu.memory_space<vmem>>, vector<1x1x128xf32>
    %7 = vector.shape_cast %6 : vector<1x1x128xf32> to vector<1x128xf32>
    %cst = arith.constant dense<0.000000e+00> : vector<16xf32>
    %8 = vector.multi_reduction <add>, %0, %cst [1] : vector<16x128xf32> to vector<16xf32>
    %9 = vector.shape_cast %8 : vector<16xf32> to vector<16x1xf32>
    %cst_11 = arith.constant 1.280000e+02 : f32
    %10 = vector.broadcast %cst_11 : f32 to vector<16x1xf32>
    %11 = arith.divf %9, %10 : vector<16x1xf32>
    %12 = arith.mulf %0, %0 : vector<16x128xf32>
    %cst_12 = arith.constant dense<0.000000e+00> : vector<16xf32>
    %13 = vector.multi_reduction <add>, %12, %cst_12 [1] : vector<16x128xf32> to vector<16xf32>
    %14 = vector.shape_cast %13 : vector<16xf32> to vector<16x1xf32>
    %cst_13 = arith.constant 1.280000e+02 : f32
    %15 = vector.broadcast %cst_13 : f32 to vector<16x1xf32>
    %16 = arith.divf %14, %15 : vector<16x1xf32>
    %17 = arith.mulf %11, %11 : vector<16x1xf32>
    %18 = arith.subf %16, %17 : vector<16x1xf32>
    %19 = vector.broadcast %11 : vector<16x1xf32> to vector<16x128xf32>
    %20 = arith.subf %0, %19 : vector<16x128xf32>
    %cst_14 = arith.constant 9.99999974E-6 : f32
    %21 = vector.broadcast %cst_14 : f32 to vector<16x1xf32>
    %22 = arith.addf %18, %21 : vector<16x1xf32>
    %23 = math.rsqrt %22 : vector<16x1xf32>
    %24 = vector.broadcast %23 : vector<16x1xf32> to vector<16x128xf32>
    %25 = arith.mulf %20, %24 : vector<16x128xf32>
    %26 = vector.broadcast %5 : vector<1x128xf32> to vector<16x128xf32>
    %27 = arith.mulf %25, %26 : vector<16x128xf32>
    %28 = vector.broadcast %7 : vector<1x128xf32> to vector<16x128xf32>
    %29 = arith.addf %27, %28 : vector<16x128xf32>
    %30 = arith.truncf %29 : vector<16x128xf32> to vector<16x128xbf16>
    %c0_15 = arith.constant 0 : index
    %c0_16 = arith.constant 0 : index
    %c0_17 = arith.constant 0 : index
    %31 = vector.load %arg5[%c0_15, %c0_16, %c0_17] : memref<2x128x384xbf16, #tpu.memory_space<vmem>>, vector<1x128x384xbf16>
    %32 = vector.shape_cast %31 : vector<1x128x384xbf16> to vector<128x384xbf16>
    %cst_18 = arith.constant dense<0.000000e+00> : vector<16x384xf32>
    %33 = tpu.matmul %30, %32, %cst_18 {dimension_numbers = #tpu.dot_dimension_numbers<[1], [0], [0], [1], [0, 0, 1, 1], [], []>} : vector<16x128xbf16>, vector<128x384xbf16>, vector<16x384xf32> -> vector<16x384xf32>
    %c0_19 = arith.constant 0 : index
    %c0_20 = arith.constant 0 : index
    %c0_21 = arith.constant 0 : index
    %34 = vector.load %arg6[%c0_19, %c0_20, %c0_21] : memref<2x1x384xf32, #tpu.memory_space<vmem>>, vector<1x1x384xf32>
    %35 = vector.shape_cast %34 : vector<1x1x384xf32> to vector<1x384xf32>
    %36 = vector.broadcast %35 : vector<1x384xf32> to vector<16x384xf32>
    %37 = arith.addf %33, %36 : vector<16x384xf32>
    %38 = arith.truncf %37 : vector<16x384xf32> to vector<16x384xbf16>
    %39 = vector.extract_strided_slice %38 {offsets = [0, 0], sizes = [16, 128], strides = [1, 1]} : vector<16x384xbf16> to vector<16x128xbf16>
    %40 = vector.extract_strided_slice %38 {offsets = [0, 128], sizes = [16, 128], strides = [1, 1]} : vector<16x384xbf16> to vector<16x128xbf16>
    %41 = vector.extract_strided_slice %38 {offsets = [0, 256], sizes = [16, 128], strides = [1, 1]} : vector<16x384xbf16> to vector<16x128xbf16>
    %42 = tpu.concatenate %39, %39, %39, %39 in 0 : vector<16x128xbf16>, vector<16x128xbf16>, vector<16x128xbf16>, vector<16x128xbf16> -> vector<64x128xbf16>
    %43 = arith.mulf %42, %2 : vector<64x128xbf16>
    %cst_22 = arith.constant dense<0.000000e+00> : vector<64x16xf32>
    %44 = tpu.matmul %43, %40, %cst_22 {dimension_numbers = #tpu.dot_dimension_numbers<[1], [1], [0], [0], [0, 0, 1, 0], [], []>} : vector<64x128xbf16>, vector<16x128xbf16>, vector<64x16xf32> -> vector<64x16xf32>
    %cst_23 = arith.constant 0.176776692 : f32
    %45 = vector.broadcast %cst_23 : f32 to vector<64x16xf32>
    %46 = arith.mulf %44, %45 : vector<64x16xf32>
    %47 = arith.addf %46, %3 : vector<64x16xf32>
    %cst_24 = arith.constant dense<0xFF800000> : vector<64xf32>
    %48 = vector.multi_reduction <maximumf>, %47, %cst_24 [1] : vector<64x16xf32> to vector<64xf32>
    %49 = vector.shape_cast %48 : vector<64xf32> to vector<64x1xf32>
    %50 = vector.broadcast %49 : vector<64x1xf32> to vector<64x16xf32>
    %51 = arith.subf %47, %50 : vector<64x16xf32>
    %52 = math.exp %51 : vector<64x16xf32>
    %cst_25 = arith.constant dense<0.000000e+00> : vector<64xf32>
    %53 = vector.multi_reduction <add>, %52, %cst_25 [1] : vector<64x16xf32> to vector<64xf32>
    %54 = vector.shape_cast %53 : vector<64xf32> to vector<64x1xf32>
    %55 = tpu.reciprocal %54 {approx = true} : vector<64x1xf32> -> vector<64x1xf32>
    %56 = vector.broadcast %55 : vector<64x1xf32> to vector<64x16xf32>
    %57 = arith.mulf %52, %56 : vector<64x16xf32>
    %58 = arith.truncf %57 : vector<64x16xf32> to vector<64x16xbf16>
    %cst_26 = arith.constant dense<0.000000e+00> : vector<64x128xf32>
    %59 = tpu.matmul %58, %41, %cst_26 {dimension_numbers = #tpu.dot_dimension_numbers<[1], [0], [0], [1], [0, 0, 1, 1], [], []>} : vector<64x16xbf16>, vector<16x128xbf16>, vector<64x128xf32> -> vector<64x128xf32>
    %60 = vector.extract_strided_slice %59 {offsets = [0, 0], sizes = [16, 128], strides = [1, 1]} : vector<64x128xf32> to vector<16x128xf32>
    %61 = vector.extract_strided_slice %1 {offsets = [0, 0], sizes = [16, 128], strides = [1, 1]} : vector<64x128xf32> to vector<16x128xf32>
    %62 = arith.mulf %60, %61 : vector<16x128xf32>
    %63 = vector.extract_strided_slice %59 {offsets = [16, 0], sizes = [16, 128], strides = [1, 1]} : vector<64x128xf32> to vector<16x128xf32>
    %64 = vector.extract_strided_slice %1 {offsets = [16, 0], sizes = [16, 128], strides = [1, 1]} : vector<64x128xf32> to vector<16x128xf32>
    %65 = arith.mulf %63, %64 : vector<16x128xf32>
    %66 = arith.addf %62, %65 : vector<16x128xf32>
    %67 = vector.extract_strided_slice %59 {offsets = [32, 0], sizes = [16, 128], strides = [1, 1]} : vector<64x128xf32> to vector<16x128xf32>
    %68 = vector.extract_strided_slice %1 {offsets = [32, 0], sizes = [16, 128], strides = [1, 1]} : vector<64x128xf32> to vector<16x128xf32>
    %69 = arith.mulf %67, %68 : vector<16x128xf32>
    %70 = arith.addf %66, %69 : vector<16x128xf32>
    %71 = vector.extract_strided_slice %59 {offsets = [48, 0], sizes = [16, 128], strides = [1, 1]} : vector<64x128xf32> to vector<16x128xf32>
    %72 = vector.extract_strided_slice %1 {offsets = [48, 0], sizes = [16, 128], strides = [1, 1]} : vector<64x128xf32> to vector<16x128xf32>
    %73 = arith.mulf %71, %72 : vector<16x128xf32>
    %74 = arith.addf %70, %73 : vector<16x128xf32>
    %75 = arith.truncf %74 : vector<16x128xf32> to vector<16x128xbf16>
    %c0_27 = arith.constant 0 : index
    %c0_28 = arith.constant 0 : index
    %c0_29 = arith.constant 0 : index
    %76 = vector.load %arg7[%c0_27, %c0_28, %c0_29] : memref<2x128x128xbf16, #tpu.memory_space<vmem>>, vector<1x128x128xbf16>
    %77 = vector.shape_cast %76 : vector<1x128x128xbf16> to vector<128x128xbf16>
    %cst_30 = arith.constant dense<0.000000e+00> : vector<16x128xf32>
    %78 = tpu.matmul %75, %77, %cst_30 {dimension_numbers = #tpu.dot_dimension_numbers<[1], [0], [0], [1], [0, 0, 1, 1], [], []>} : vector<16x128xbf16>, vector<128x128xbf16>, vector<16x128xf32> -> vector<16x128xf32>
    %79 = arith.addf %0, %78 : vector<16x128xf32>
    %c0_31 = arith.constant 0 : index
    %c0_32 = arith.constant 0 : index
    %c0_33 = arith.constant 0 : index
    %80 = vector.load %arg8[%c0_31, %c0_32, %c0_33] : memref<2x1x128xf32, #tpu.memory_space<vmem>>, vector<1x1x128xf32>
    %81 = vector.shape_cast %80 : vector<1x1x128xf32> to vector<1x128xf32>
    %82 = vector.broadcast %81 : vector<1x128xf32> to vector<16x128xf32>
    %83 = arith.addf %79, %82 : vector<16x128xf32>
    %c0_34 = arith.constant 0 : index
    %c0_35 = arith.constant 0 : index
    %c0_36 = arith.constant 0 : index
    %84 = vector.load %arg9[%c0_34, %c0_35, %c0_36] : memref<2x1x128xf32, #tpu.memory_space<vmem>>, vector<1x1x128xf32>
    %85 = vector.shape_cast %84 : vector<1x1x128xf32> to vector<1x128xf32>
    %c0_37 = arith.constant 0 : index
    %c0_38 = arith.constant 0 : index
    %c0_39 = arith.constant 0 : index
    %86 = vector.load %arg10[%c0_37, %c0_38, %c0_39] : memref<2x1x128xf32, #tpu.memory_space<vmem>>, vector<1x1x128xf32>
    %87 = vector.shape_cast %86 : vector<1x1x128xf32> to vector<1x128xf32>
    %cst_40 = arith.constant dense<0.000000e+00> : vector<16xf32>
    %88 = vector.multi_reduction <add>, %83, %cst_40 [1] : vector<16x128xf32> to vector<16xf32>
    %89 = vector.shape_cast %88 : vector<16xf32> to vector<16x1xf32>
    %cst_41 = arith.constant 1.280000e+02 : f32
    %90 = vector.broadcast %cst_41 : f32 to vector<16x1xf32>
    %91 = arith.divf %89, %90 : vector<16x1xf32>
    %92 = arith.mulf %83, %83 : vector<16x128xf32>
    %cst_42 = arith.constant dense<0.000000e+00> : vector<16xf32>
    %93 = vector.multi_reduction <add>, %92, %cst_42 [1] : vector<16x128xf32> to vector<16xf32>
    %94 = vector.shape_cast %93 : vector<16xf32> to vector<16x1xf32>
    %cst_43 = arith.constant 1.280000e+02 : f32
    %95 = vector.broadcast %cst_43 : f32 to vector<16x1xf32>
    %96 = arith.divf %94, %95 : vector<16x1xf32>
    %97 = arith.mulf %91, %91 : vector<16x1xf32>
    %98 = arith.subf %96, %97 : vector<16x1xf32>
    %99 = vector.broadcast %91 : vector<16x1xf32> to vector<16x128xf32>
    %100 = arith.subf %83, %99 : vector<16x128xf32>
    %cst_44 = arith.constant 9.99999974E-6 : f32
    %101 = vector.broadcast %cst_44 : f32 to vector<16x1xf32>
    %102 = arith.addf %98, %101 : vector<16x1xf32>
    %103 = math.rsqrt %102 : vector<16x1xf32>
    %104 = vector.broadcast %103 : vector<16x1xf32> to vector<16x128xf32>
    %105 = arith.mulf %100, %104 : vector<16x128xf32>
    %106 = vector.broadcast %85 : vector<1x128xf32> to vector<16x128xf32>
    %107 = arith.mulf %105, %106 : vector<16x128xf32>
    %108 = vector.broadcast %87 : vector<1x128xf32> to vector<16x128xf32>
    %109 = arith.addf %107, %108 : vector<16x128xf32>
    %110 = arith.truncf %109 : vector<16x128xf32> to vector<16x128xbf16>
    %c0_45 = arith.constant 0 : index
    %c0_46 = arith.constant 0 : index
    %c0_47 = arith.constant 0 : index
    %111 = vector.load %arg11[%c0_45, %c0_46, %c0_47] : memref<2x128x256xbf16, #tpu.memory_space<vmem>>, vector<1x128x256xbf16>
    %112 = vector.shape_cast %111 : vector<1x128x256xbf16> to vector<128x256xbf16>
    %cst_48 = arith.constant dense<0.000000e+00> : vector<16x256xf32>
    %113 = tpu.matmul %110, %112, %cst_48 {dimension_numbers = #tpu.dot_dimension_numbers<[1], [0], [0], [1], [0, 0, 1, 1], [], []>} : vector<16x128xbf16>, vector<128x256xbf16>, vector<16x256xf32> -> vector<16x256xf32>
    %c0_49 = arith.constant 0 : index
    %c0_50 = arith.constant 0 : index
    %c0_51 = arith.constant 0 : index
    %114 = vector.load %arg12[%c0_49, %c0_50, %c0_51] : memref<2x1x256xf32, #tpu.memory_space<vmem>>, vector<1x1x256xf32>
    %115 = vector.shape_cast %114 : vector<1x1x256xf32> to vector<1x256xf32>
    %116 = vector.broadcast %115 : vector<1x256xf32> to vector<16x256xf32>
    %117 = arith.addf %113, %116 : vector<16x256xf32>
    %118 = arith.mulf %117, %117 : vector<16x256xf32>
    %119 = arith.mulf %117, %118 : vector<16x256xf32>
    %cst_52 = arith.constant 4.471500e-02 : f32
    %120 = vector.broadcast %cst_52 : f32 to vector<16x256xf32>
    %121 = arith.mulf %120, %119 : vector<16x256xf32>
    %122 = arith.addf %117, %121 : vector<16x256xf32>
    %cst_53 = arith.constant 0.797884583 : f32
    %123 = vector.broadcast %cst_53 : f32 to vector<16x256xf32>
    %124 = arith.mulf %123, %122 : vector<16x256xf32>
    %125 = math.tanh %124 : vector<16x256xf32>
    %cst_54 = arith.constant 1.000000e+00 : f32
    %126 = vector.broadcast %cst_54 : f32 to vector<16x256xf32>
    %127 = arith.addf %126, %125 : vector<16x256xf32>
    %cst_55 = arith.constant 5.000000e-01 : f32
    %128 = vector.broadcast %cst_55 : f32 to vector<16x256xf32>
    %129 = arith.mulf %128, %127 : vector<16x256xf32>
    %130 = arith.mulf %117, %129 : vector<16x256xf32>
    %131 = arith.truncf %130 : vector<16x256xf32> to vector<16x256xbf16>
    %c0_56 = arith.constant 0 : index
    %c0_57 = arith.constant 0 : index
    %c0_58 = arith.constant 0 : index
    %132 = vector.load %arg13[%c0_56, %c0_57, %c0_58] : memref<2x256x128xbf16, #tpu.memory_space<vmem>>, vector<1x256x128xbf16>
    %133 = vector.shape_cast %132 : vector<1x256x128xbf16> to vector<256x128xbf16>
    %cst_59 = arith.constant dense<0.000000e+00> : vector<16x128xf32>
    %134 = tpu.matmul %131, %133, %cst_59 {dimension_numbers = #tpu.dot_dimension_numbers<[1], [0], [0], [1], [0, 0, 1, 1], [], []>} : vector<16x256xbf16>, vector<256x128xbf16>, vector<16x128xf32> -> vector<16x128xf32>
    %135 = arith.addf %83, %134 : vector<16x128xf32>
    %c0_60 = arith.constant 0 : index
    %c0_61 = arith.constant 0 : index
    %c0_62 = arith.constant 0 : index
    %136 = vector.load %arg14[%c0_60, %c0_61, %c0_62] : memref<2x1x128xf32, #tpu.memory_space<vmem>>, vector<1x1x128xf32>
    %137 = vector.shape_cast %136 : vector<1x1x128xf32> to vector<1x128xf32>
    %138 = vector.broadcast %137 : vector<1x128xf32> to vector<16x128xf32>
    %139 = arith.addf %135, %138 : vector<16x128xf32>
    %c1 = arith.constant 1 : index
    %c0_63 = arith.constant 0 : index
    %c0_64 = arith.constant 0 : index
    %140 = vector.load %arg3[%c1, %c0_63, %c0_64] : memref<2x1x128xf32, #tpu.memory_space<vmem>>, vector<1x1x128xf32>
    %141 = vector.shape_cast %140 : vector<1x1x128xf32> to vector<1x128xf32>
    %c1_65 = arith.constant 1 : index
    %c0_66 = arith.constant 0 : index
    %c0_67 = arith.constant 0 : index
    %142 = vector.load %arg4[%c1_65, %c0_66, %c0_67] : memref<2x1x128xf32, #tpu.memory_space<vmem>>, vector<1x1x128xf32>
    %143 = vector.shape_cast %142 : vector<1x1x128xf32> to vector<1x128xf32>
    %cst_68 = arith.constant dense<0.000000e+00> : vector<16xf32>
    %144 = vector.multi_reduction <add>, %139, %cst_68 [1] : vector<16x128xf32> to vector<16xf32>
    %145 = vector.shape_cast %144 : vector<16xf32> to vector<16x1xf32>
    %cst_69 = arith.constant 1.280000e+02 : f32
    %146 = vector.broadcast %cst_69 : f32 to vector<16x1xf32>
    %147 = arith.divf %145, %146 : vector<16x1xf32>
    %148 = arith.mulf %139, %139 : vector<16x128xf32>
    %cst_70 = arith.constant dense<0.000000e+00> : vector<16xf32>
    %149 = vector.multi_reduction <add>, %148, %cst_70 [1] : vector<16x128xf32> to vector<16xf32>
    %150 = vector.shape_cast %149 : vector<16xf32> to vector<16x1xf32>
    %cst_71 = arith.constant 1.280000e+02 : f32
    %151 = vector.broadcast %cst_71 : f32 to vector<16x1xf32>
    %152 = arith.divf %150, %151 : vector<16x1xf32>
    %153 = arith.mulf %147, %147 : vector<16x1xf32>
    %154 = arith.subf %152, %153 : vector<16x1xf32>
    %155 = vector.broadcast %147 : vector<16x1xf32> to vector<16x128xf32>
    %156 = arith.subf %139, %155 : vector<16x128xf32>
    %cst_72 = arith.constant 9.99999974E-6 : f32
    %157 = vector.broadcast %cst_72 : f32 to vector<16x1xf32>
    %158 = arith.addf %154, %157 : vector<16x1xf32>
    %159 = math.rsqrt %158 : vector<16x1xf32>
    %160 = vector.broadcast %159 : vector<16x1xf32> to vector<16x128xf32>
    %161 = arith.mulf %156, %160 : vector<16x128xf32>
    %162 = vector.broadcast %141 : vector<1x128xf32> to vector<16x128xf32>
    %163 = arith.mulf %161, %162 : vector<16x128xf32>
    %164 = vector.broadcast %143 : vector<1x128xf32> to vector<16x128xf32>
    %165 = arith.addf %163, %164 : vector<16x128xf32>
    %166 = arith.truncf %165 : vector<16x128xf32> to vector<16x128xbf16>
    %c1_73 = arith.constant 1 : index
    %c0_74 = arith.constant 0 : index
    %c0_75 = arith.constant 0 : index
    %167 = vector.load %arg5[%c1_73, %c0_74, %c0_75] : memref<2x128x384xbf16, #tpu.memory_space<vmem>>, vector<1x128x384xbf16>
    %168 = vector.shape_cast %167 : vector<1x128x384xbf16> to vector<128x384xbf16>
    %cst_76 = arith.constant dense<0.000000e+00> : vector<16x384xf32>
    %169 = tpu.matmul %166, %168, %cst_76 {dimension_numbers = #tpu.dot_dimension_numbers<[1], [0], [0], [1], [0, 0, 1, 1], [], []>} : vector<16x128xbf16>, vector<128x384xbf16>, vector<16x384xf32> -> vector<16x384xf32>
    %c1_77 = arith.constant 1 : index
    %c0_78 = arith.constant 0 : index
    %c0_79 = arith.constant 0 : index
    %170 = vector.load %arg6[%c1_77, %c0_78, %c0_79] : memref<2x1x384xf32, #tpu.memory_space<vmem>>, vector<1x1x384xf32>
    %171 = vector.shape_cast %170 : vector<1x1x384xf32> to vector<1x384xf32>
    %172 = vector.broadcast %171 : vector<1x384xf32> to vector<16x384xf32>
    %173 = arith.addf %169, %172 : vector<16x384xf32>
    %174 = arith.truncf %173 : vector<16x384xf32> to vector<16x384xbf16>
    %175 = vector.extract_strided_slice %174 {offsets = [0, 0], sizes = [16, 128], strides = [1, 1]} : vector<16x384xbf16> to vector<16x128xbf16>
    %176 = vector.extract_strided_slice %174 {offsets = [0, 128], sizes = [16, 128], strides = [1, 1]} : vector<16x384xbf16> to vector<16x128xbf16>
    %177 = vector.extract_strided_slice %174 {offsets = [0, 256], sizes = [16, 128], strides = [1, 1]} : vector<16x384xbf16> to vector<16x128xbf16>
    %178 = tpu.concatenate %175, %175, %175, %175 in 0 : vector<16x128xbf16>, vector<16x128xbf16>, vector<16x128xbf16>, vector<16x128xbf16> -> vector<64x128xbf16>
    %179 = arith.mulf %178, %2 : vector<64x128xbf16>
    %cst_80 = arith.constant dense<0.000000e+00> : vector<64x16xf32>
    %180 = tpu.matmul %179, %176, %cst_80 {dimension_numbers = #tpu.dot_dimension_numbers<[1], [1], [0], [0], [0, 0, 1, 0], [], []>} : vector<64x128xbf16>, vector<16x128xbf16>, vector<64x16xf32> -> vector<64x16xf32>
    %cst_81 = arith.constant 0.176776692 : f32
    %181 = vector.broadcast %cst_81 : f32 to vector<64x16xf32>
    %182 = arith.mulf %180, %181 : vector<64x16xf32>
    %183 = arith.addf %182, %3 : vector<64x16xf32>
    %cst_82 = arith.constant dense<0xFF800000> : vector<64xf32>
    %184 = vector.multi_reduction <maximumf>, %183, %cst_82 [1] : vector<64x16xf32> to vector<64xf32>
    %185 = vector.shape_cast %184 : vector<64xf32> to vector<64x1xf32>
    %186 = vector.broadcast %185 : vector<64x1xf32> to vector<64x16xf32>
    %187 = arith.subf %183, %186 : vector<64x16xf32>
    %188 = math.exp %187 : vector<64x16xf32>
    %cst_83 = arith.constant dense<0.000000e+00> : vector<64xf32>
    %189 = vector.multi_reduction <add>, %188, %cst_83 [1] : vector<64x16xf32> to vector<64xf32>
    %190 = vector.shape_cast %189 : vector<64xf32> to vector<64x1xf32>
    %191 = tpu.reciprocal %190 {approx = true} : vector<64x1xf32> -> vector<64x1xf32>
    %192 = vector.broadcast %191 : vector<64x1xf32> to vector<64x16xf32>
    %193 = arith.mulf %188, %192 : vector<64x16xf32>
    %194 = arith.truncf %193 : vector<64x16xf32> to vector<64x16xbf16>
    %cst_84 = arith.constant dense<0.000000e+00> : vector<64x128xf32>
    %195 = tpu.matmul %194, %177, %cst_84 {dimension_numbers = #tpu.dot_dimension_numbers<[1], [0], [0], [1], [0, 0, 1, 1], [], []>} : vector<64x16xbf16>, vector<16x128xbf16>, vector<64x128xf32> -> vector<64x128xf32>
    %196 = vector.extract_strided_slice %195 {offsets = [0, 0], sizes = [16, 128], strides = [1, 1]} : vector<64x128xf32> to vector<16x128xf32>
    %197 = vector.extract_strided_slice %1 {offsets = [0, 0], sizes = [16, 128], strides = [1, 1]} : vector<64x128xf32> to vector<16x128xf32>
    %198 = arith.mulf %196, %197 : vector<16x128xf32>
    %199 = vector.extract_strided_slice %195 {offsets = [16, 0], sizes = [16, 128], strides = [1, 1]} : vector<64x128xf32> to vector<16x128xf32>
    %200 = vector.extract_strided_slice %1 {offsets = [16, 0], sizes = [16, 128], strides = [1, 1]} : vector<64x128xf32> to vector<16x128xf32>
    %201 = arith.mulf %199, %200 : vector<16x128xf32>
    %202 = arith.addf %198, %201 : vector<16x128xf32>
    %203 = vector.extract_strided_slice %195 {offsets = [32, 0], sizes = [16, 128], strides = [1, 1]} : vector<64x128xf32> to vector<16x128xf32>
    %204 = vector.extract_strided_slice %1 {offsets = [32, 0], sizes = [16, 128], strides = [1, 1]} : vector<64x128xf32> to vector<16x128xf32>
    %205 = arith.mulf %203, %204 : vector<16x128xf32>
    %206 = arith.addf %202, %205 : vector<16x128xf32>
    %207 = vector.extract_strided_slice %195 {offsets = [48, 0], sizes = [16, 128], strides = [1, 1]} : vector<64x128xf32> to vector<16x128xf32>
    %208 = vector.extract_strided_slice %1 {offsets = [48, 0], sizes = [16, 128], strides = [1, 1]} : vector<64x128xf32> to vector<16x128xf32>
    %209 = arith.mulf %207, %208 : vector<16x128xf32>
    %210 = arith.addf %206, %209 : vector<16x128xf32>
    %211 = arith.truncf %210 : vector<16x128xf32> to vector<16x128xbf16>
    %c1_85 = arith.constant 1 : index
    %c0_86 = arith.constant 0 : index
    %c0_87 = arith.constant 0 : index
    %212 = vector.load %arg7[%c1_85, %c0_86, %c0_87] : memref<2x128x128xbf16, #tpu.memory_space<vmem>>, vector<1x128x128xbf16>
    %213 = vector.shape_cast %212 : vector<1x128x128xbf16> to vector<128x128xbf16>
    %cst_88 = arith.constant dense<0.000000e+00> : vector<16x128xf32>
    %214 = tpu.matmul %211, %213, %cst_88 {dimension_numbers = #tpu.dot_dimension_numbers<[1], [0], [0], [1], [0, 0, 1, 1], [], []>} : vector<16x128xbf16>, vector<128x128xbf16>, vector<16x128xf32> -> vector<16x128xf32>
    %215 = arith.addf %139, %214 : vector<16x128xf32>
    %c1_89 = arith.constant 1 : index
    %c0_90 = arith.constant 0 : index
    %c0_91 = arith.constant 0 : index
    %216 = vector.load %arg8[%c1_89, %c0_90, %c0_91] : memref<2x1x128xf32, #tpu.memory_space<vmem>>, vector<1x1x128xf32>
    %217 = vector.shape_cast %216 : vector<1x1x128xf32> to vector<1x128xf32>
    %218 = vector.broadcast %217 : vector<1x128xf32> to vector<16x128xf32>
    %219 = arith.addf %215, %218 : vector<16x128xf32>
    %c1_92 = arith.constant 1 : index
    %c0_93 = arith.constant 0 : index
    %c0_94 = arith.constant 0 : index
    %220 = vector.load %arg9[%c1_92, %c0_93, %c0_94] : memref<2x1x128xf32, #tpu.memory_space<vmem>>, vector<1x1x128xf32>
    %221 = vector.shape_cast %220 : vector<1x1x128xf32> to vector<1x128xf32>
    %c1_95 = arith.constant 1 : index
    %c0_96 = arith.constant 0 : index
    %c0_97 = arith.constant 0 : index
    %222 = vector.load %arg10[%c1_95, %c0_96, %c0_97] : memref<2x1x128xf32, #tpu.memory_space<vmem>>, vector<1x1x128xf32>
    %223 = vector.shape_cast %222 : vector<1x1x128xf32> to vector<1x128xf32>
    %cst_98 = arith.constant dense<0.000000e+00> : vector<16xf32>
    %224 = vector.multi_reduction <add>, %219, %cst_98 [1] : vector<16x128xf32> to vector<16xf32>
    %225 = vector.shape_cast %224 : vector<16xf32> to vector<16x1xf32>
    %cst_99 = arith.constant 1.280000e+02 : f32
    %226 = vector.broadcast %cst_99 : f32 to vector<16x1xf32>
    %227 = arith.divf %225, %226 : vector<16x1xf32>
    %228 = arith.mulf %219, %219 : vector<16x128xf32>
    %cst_100 = arith.constant dense<0.000000e+00> : vector<16xf32>
    %229 = vector.multi_reduction <add>, %228, %cst_100 [1] : vector<16x128xf32> to vector<16xf32>
    %230 = vector.shape_cast %229 : vector<16xf32> to vector<16x1xf32>
    %cst_101 = arith.constant 1.280000e+02 : f32
    %231 = vector.broadcast %cst_101 : f32 to vector<16x1xf32>
    %232 = arith.divf %230, %231 : vector<16x1xf32>
    %233 = arith.mulf %227, %227 : vector<16x1xf32>
    %234 = arith.subf %232, %233 : vector<16x1xf32>
    %235 = vector.broadcast %227 : vector<16x1xf32> to vector<16x128xf32>
    %236 = arith.subf %219, %235 : vector<16x128xf32>
    %cst_102 = arith.constant 9.99999974E-6 : f32
    %237 = vector.broadcast %cst_102 : f32 to vector<16x1xf32>
    %238 = arith.addf %234, %237 : vector<16x1xf32>
    %239 = math.rsqrt %238 : vector<16x1xf32>
    %240 = vector.broadcast %239 : vector<16x1xf32> to vector<16x128xf32>
    %241 = arith.mulf %236, %240 : vector<16x128xf32>
    %242 = vector.broadcast %221 : vector<1x128xf32> to vector<16x128xf32>
    %243 = arith.mulf %241, %242 : vector<16x128xf32>
    %244 = vector.broadcast %223 : vector<1x128xf32> to vector<16x128xf32>
    %245 = arith.addf %243, %244 : vector<16x128xf32>
    %246 = arith.truncf %245 : vector<16x128xf32> to vector<16x128xbf16>
    %c1_103 = arith.constant 1 : index
    %c0_104 = arith.constant 0 : index
    %c0_105 = arith.constant 0 : index
    %247 = vector.load %arg11[%c1_103, %c0_104, %c0_105] : memref<2x128x256xbf16, #tpu.memory_space<vmem>>, vector<1x128x256xbf16>
    %248 = vector.shape_cast %247 : vector<1x128x256xbf16> to vector<128x256xbf16>
    %cst_106 = arith.constant dense<0.000000e+00> : vector<16x256xf32>
    %249 = tpu.matmul %246, %248, %cst_106 {dimension_numbers = #tpu.dot_dimension_numbers<[1], [0], [0], [1], [0, 0, 1, 1], [], []>} : vector<16x128xbf16>, vector<128x256xbf16>, vector<16x256xf32> -> vector<16x256xf32>
    %c1_107 = arith.constant 1 : index
    %c0_108 = arith.constant 0 : index
    %c0_109 = arith.constant 0 : index
    %250 = vector.load %arg12[%c1_107, %c0_108, %c0_109] : memref<2x1x256xf32, #tpu.memory_space<vmem>>, vector<1x1x256xf32>
    %251 = vector.shape_cast %250 : vector<1x1x256xf32> to vector<1x256xf32>
    %252 = vector.broadcast %251 : vector<1x256xf32> to vector<16x256xf32>
    %253 = arith.addf %249, %252 : vector<16x256xf32>
    %254 = arith.mulf %253, %253 : vector<16x256xf32>
    %255 = arith.mulf %253, %254 : vector<16x256xf32>
    %cst_110 = arith.constant 4.471500e-02 : f32
    %256 = vector.broadcast %cst_110 : f32 to vector<16x256xf32>
    %257 = arith.mulf %256, %255 : vector<16x256xf32>
    %258 = arith.addf %253, %257 : vector<16x256xf32>
    %cst_111 = arith.constant 0.797884583 : f32
    %259 = vector.broadcast %cst_111 : f32 to vector<16x256xf32>
    %260 = arith.mulf %259, %258 : vector<16x256xf32>
    %261 = math.tanh %260 : vector<16x256xf32>
    %cst_112 = arith.constant 1.000000e+00 : f32
    %262 = vector.broadcast %cst_112 : f32 to vector<16x256xf32>
    %263 = arith.addf %262, %261 : vector<16x256xf32>
    %cst_113 = arith.constant 5.000000e-01 : f32
    %264 = vector.broadcast %cst_113 : f32 to vector<16x256xf32>
    %265 = arith.mulf %264, %263 : vector<16x256xf32>
    %266 = arith.mulf %253, %265 : vector<16x256xf32>
    %267 = arith.truncf %266 : vector<16x256xf32> to vector<16x256xbf16>
    %c1_114 = arith.constant 1 : index
    %c0_115 = arith.constant 0 : index
    %c0_116 = arith.constant 0 : index
    %268 = vector.load %arg13[%c1_114, %c0_115, %c0_116] : memref<2x256x128xbf16, #tpu.memory_space<vmem>>, vector<1x256x128xbf16>
    %269 = vector.shape_cast %268 : vector<1x256x128xbf16> to vector<256x128xbf16>
    %cst_117 = arith.constant dense<0.000000e+00> : vector<16x128xf32>
    %270 = tpu.matmul %267, %269, %cst_117 {dimension_numbers = #tpu.dot_dimension_numbers<[1], [0], [0], [1], [0, 0, 1, 1], [], []>} : vector<16x256xbf16>, vector<256x128xbf16>, vector<16x128xf32> -> vector<16x128xf32>
    %271 = arith.addf %219, %270 : vector<16x128xf32>
    %c1_118 = arith.constant 1 : index
    %c0_119 = arith.constant 0 : index
    %c0_120 = arith.constant 0 : index
    %272 = vector.load %arg14[%c1_118, %c0_119, %c0_120] : memref<2x1x128xf32, #tpu.memory_space<vmem>>, vector<1x1x128xf32>
    %273 = vector.shape_cast %272 : vector<1x1x128xf32> to vector<1x128xf32>
    %274 = vector.broadcast %273 : vector<1x128xf32> to vector<16x128xf32>
    %275 = arith.addf %271, %274 : vector<16x128xf32>
    %c0_121 = arith.constant 0 : index
    %c0_122 = arith.constant 0 : index
    %276 = vector.load %arg15[%c0_121, %c0_122] : memref<1x128xf32, #tpu.memory_space<vmem>>, vector<1x128xf32>
    %c0_123 = arith.constant 0 : index
    %c0_124 = arith.constant 0 : index
    %277 = vector.load %arg16[%c0_123, %c0_124] : memref<1x128xf32, #tpu.memory_space<vmem>>, vector<1x128xf32>
    %cst_125 = arith.constant dense<0.000000e+00> : vector<16xf32>
    %278 = vector.multi_reduction <add>, %275, %cst_125 [1] : vector<16x128xf32> to vector<16xf32>
    %279 = vector.shape_cast %278 : vector<16xf32> to vector<16x1xf32>
    %cst_126 = arith.constant 1.280000e+02 : f32
    %280 = vector.broadcast %cst_126 : f32 to vector<16x1xf32>
    %281 = arith.divf %279, %280 : vector<16x1xf32>
    %282 = arith.mulf %275, %275 : vector<16x128xf32>
    %cst_127 = arith.constant dense<0.000000e+00> : vector<16xf32>
    %283 = vector.multi_reduction <add>, %282, %cst_127 [1] : vector<16x128xf32> to vector<16xf32>
    %284 = vector.shape_cast %283 : vector<16xf32> to vector<16x1xf32>
    %cst_128 = arith.constant 1.280000e+02 : f32
    %285 = vector.broadcast %cst_128 : f32 to vector<16x1xf32>
    %286 = arith.divf %284, %285 : vector<16x1xf32>
    %287 = arith.mulf %281, %281 : vector<16x1xf32>
    %288 = arith.subf %286, %287 : vector<16x1xf32>
    %289 = vector.broadcast %281 : vector<16x1xf32> to vector<16x128xf32>
    %290 = arith.subf %275, %289 : vector<16x128xf32>
    %cst_129 = arith.constant 9.99999974E-6 : f32
    %291 = vector.broadcast %cst_129 : f32 to vector<16x1xf32>
    %292 = arith.addf %288, %291 : vector<16x1xf32>
    %293 = math.rsqrt %292 : vector<16x1xf32>
    %294 = vector.broadcast %293 : vector<16x1xf32> to vector<16x128xf32>
    %295 = arith.mulf %290, %294 : vector<16x128xf32>
    %296 = vector.broadcast %276 : vector<1x128xf32> to vector<16x128xf32>
    %297 = arith.mulf %295, %296 : vector<16x128xf32>
    %298 = vector.broadcast %277 : vector<1x128xf32> to vector<16x128xf32>
    %299 = arith.addf %297, %298 : vector<16x128xf32>
    %300 = arith.truncf %299 : vector<16x128xf32> to vector<16x128xbf16>
    %c0_130 = arith.constant 0 : index
    %c0_131 = arith.constant 0 : index
    %301 = vector.load %arg17[%c0_130, %c0_131] : memref<128x256xbf16, #tpu.memory_space<vmem>>, vector<128x256xbf16>
    %cst_132 = arith.constant dense<0.000000e+00> : vector<16x256xf32>
    %302 = tpu.matmul %300, %301, %cst_132 {dimension_numbers = #tpu.dot_dimension_numbers<[1], [0], [0], [1], [0, 0, 1, 1], [], []>} : vector<16x128xbf16>, vector<128x256xbf16>, vector<16x256xf32> -> vector<16x256xf32>
    %c0_133 = arith.constant 0 : index
    %c0_134 = arith.constant 0 : index
    %303 = vector.load %arg18[%c0_133, %c0_134] : memref<1x256xf32, #tpu.memory_space<vmem>>, vector<1x256xf32>
    %304 = vector.broadcast %303 : vector<1x256xf32> to vector<16x256xf32>
    %305 = arith.addf %302, %304 : vector<16x256xf32>
    %c0_135 = arith.constant 0 : index
    %c0_136 = arith.constant 0 : index
    %306 = vector.load %arg19[%c0_135, %c0_136] : memref<16x256xf32, #tpu.memory_space<vmem>>, vector<16x256xf32>
    tpu.vector_store %arg19[%c0_135, %c0_136], %305 {strides = array<i32>} : memref<16x256xf32, #tpu.memory_space<vmem>>, vector<16x256xf32>,
    return
  }
}

</mosaic_0001>

<llo_original>
// kernel: forward.1
$region0: #{forward.1}
  #allocation0 [shape = 'u32[]', space=smem, size = 0x4, offset = 0x4, fixed_abs, tag = 'smem constant byte address 0x4 - core index']
  #allocation1 [shape = 'u32[144,128]{1,0:T(1,128)}', space=vmem, size = 0x12000, scoped, tag = 'internal scratch']
  %s0 = inlined_call_operand.vmem [shape: f32[16,128], index: 0, kind: input, shape index: {}]
  %s1 = inlined_call_operand.hbm [shape: f32[64,128], index: 1, kind: input, shape index: {}]
  %s2 = inlined_call_operand.hbm [shape: f32[64,16], index: 2, kind: input, shape index: {}]
  %s3 = inlined_call_operand.vmem [shape: f32[2,1,128], index: 3, kind: input, shape index: {}]
  %s4 = inlined_call_operand.vmem [shape: f32[2,1,128], index: 4, kind: input, shape index: {}]
  %s5 = inlined_call_operand.hbm [shape: bf16[2,128,384], index: 5, kind: input, shape index: {}]
  %s6 = inlined_call_operand.vmem [shape: f32[2,1,384], index: 6, kind: input, shape index: {}]
  %s7 = inlined_call_operand.hbm [shape: bf16[2,128,128], index: 7, kind: input, shape index: {}]
  %s8 = inlined_call_operand.vmem [shape: f32[2,1,128], index: 8, kind: input, shape index: {}]
  %s9 = inlined_call_operand.vmem [shape: f32[2,1,128], index: 9, kind: input, shape index: {}]
  %s10 = inlined_call_operand.vmem [shape: f32[2,1,128], index: 10, kind: input, shape index: {}]
  %s11 = inlined_call_operand.vmem [shape: bf16[2,128,256], index: 11, kind: input, shape index: {}]
  %s12 = inlined_call_operand.vmem [shape: f32[2,1,256], index: 12, kind: input, shape index: {}]
  %s13 = inlined_call_operand.hbm [shape: bf16[2,256,128], index: 13, kind: input, shape index: {}]
  %s14 = inlined_call_operand.vmem [shape: f32[2,1,128], index: 14, kind: input, shape index: {}]
  %s15 = inlined_call_operand.vmem [shape: f32[1,128], index: 15, kind: input, shape index: {}]
  %s16 = inlined_call_operand.vmem [shape: f32[1,128], index: 16, kind: input, shape index: {}]
  %s17 = inlined_call_operand.hbm [shape: bf16[128,256], index: 17, kind: input, shape index: {}]
  %s18 = inlined_call_operand.vmem [shape: f32[1,256], index: 18, kind: input, shape index: {}]
  %s19 = inlined_call_operand.hbm [shape: f32[16,256], index: 19, kind: output, shape index: {}]
  %s20 = sld [smem:[#allocation0]]
  $region110: #{forward.1} parent=0
    _
  %s22 = ssub.s32 1, %s20
  %s23 = scalar_select 0, %s22, %s20
  $region1: #{forward.1} parent=0
    #allocation2 [shape = 'u8[32768]{0}', space=vmem, size = 0x8000, scoped, tag = 'input window, operand 1, single buffered']
    #allocation3 [shape = 's32[1]{0}', space=sflag, size = 0x4, scoped, tag = 'scoped memory for forward.1']
    #allocation4 [shape = 's32[1]{0}', space=sflag, size = 0x4, scoped, tag = 'scoped memory for forward.1']
    #allocation5 [shape = 'u8[32768]{0}', space=vmem, size = 0x8000, scoped, tag = 'input window, operand 2, single buffered']
    #allocation6 [shape = 's32[1]{0}', space=sflag, size = 0x4, scoped, tag = 'scoped memory for forward.1']
    #allocation7 [shape = 'u8[196608]{0}', space=vmem, size = 0x30000, scoped, tag = 'input window, operand 5, single buffered']
    #allocation8 [shape = 'u8[65536]{0}', space=vmem, size = 0x10000, scoped, tag = 'input window, operand 7, single buffered']
    #allocation9 [shape = 's32[1]{0}', space=sflag, size = 0x4, scoped, tag = 'scoped memory for forward.1']
    #allocation10 [shape = 'u8[131072]{0}', space=vmem, size = 0x20000, scoped, tag = 'input window, operand 13, single buffered']
    #allocation11 [shape = 'u8[65536]{0}', space=vmem, size = 0x10000, scoped, tag = 'input window, operand 17, single buffered']
    #allocation12 [shape = 's32[1]{0}', space=sflag, size = 0x4, scoped, tag = 'scoped memory for forward.1']
    #allocation13 [shape = 'u8[16384]{0}', space=vmem, size = 0x4000, scoped, tag = 'output window, operand 0, single buffered']
    %24 = vsyncpa [#allocation3], 0
    %25 = vsyncpa [#allocation6], 0
    %26 = vsyncpa [#allocation9], 0
    %27 = vsyncpa [#allocation12], 0
    %28 = vsyncpa [#allocation4], 0
    // Predicated region
    $region2: #{forward.1} parent=1 // pred_check
      _
    $region3: #{forward.1} parent=1 // pred_check_branch
      %30 = sbr.rel (0) target = $region5
    $region4: #{forward.1} parent=1 // pred_region
      _
    $region5: #{forward.1} parent=1 // pred_fallthru
      _
    // Predicated region
    $region6: #{forward.1} parent=1 // pred_check
      _
    $region7: #{forward.1} parent=1 // pred_check_branch
      %32 = sbr.rel (0) target = $region9
    $region8: #{forward.1} parent=1 // pred_region
      %s34 = ssub.s32 1024, 1024
      %35 = vsyncadd [#allocation3], %s34
      %s36 = sshll.u32 [#allocation2], 4
      %s37 = int_to_ptr.vmem [resolvable:$true] %s36
      %42 = dma.hbm_to_vmem [thread:$0]  %s1, 1024, %s37, [#allocation3], 128, 128, 8
    $region9: #{forward.1} parent=1 // pred_fallthru
      _
    // Predicated region
    $region10: #{forward.1} parent=1 // pred_check
      _
    $region11: #{forward.1} parent=1 // pred_check_branch
      %44 = sbr.rel (0) target = $region13
    $region12: #{forward.1} parent=1 // pred_region
      %s46 = ssub.s32 1024, 1024
      %47 = vsyncadd [#allocation6], %s46
      %s48 = sshll.u32 [#allocation5], 4
      %s49 = int_to_ptr.vmem [resolvable:$true] %s48
      %54 = dma.hbm_to_vmem [thread:$0]  %s2, 1024, %s49, [#allocation6], 128, 128, 8
    $region13: #{forward.1} parent=1 // pred_fallthru
      _
    // Predicated region
    $region14: #{forward.1} parent=1 // pred_check
      _
    $region15: #{forward.1} parent=1 // pred_check_branch
      %56 = sbr.rel (0) target = $region17
    $region16: #{forward.1} parent=1 // pred_region
      _
    $region17: #{forward.1} parent=1 // pred_fallthru
      _
    // Predicated region
    $region18: #{forward.1} parent=1 // pred_check
      _
    $region19: #{forward.1} parent=1 // pred_check_branch
      %58 = sbr.rel (0) target = $region21
    $region20: #{forward.1} parent=1 // pred_region
      _
    $region21: #{forward.1} parent=1 // pred_fallthru
      _
    // Predicated region
    $region22: #{forward.1} parent=1 // pred_check
      _
    $region23: #{forward.1} parent=1 // pred_check_branch
      %60 = sbr.rel (0) target = $region25
    $region24: #{forward.1} parent=1 // pred_region
      %s62 = ssub.s32 6144, 6144
      %63 = vsyncadd [#allocation6], %s62
      %s64 = sshll.u32 [#allocation7], 4
      %s65 = int_to_ptr.vmem [resolvable:$true] %s64
      %70 = dma.hbm_to_vmem [thread:$0]  %s5, 6144, %s65, [#allocation6], 192, 192, 12
    $region25: #{forward.1} parent=1 // pred_fallthru
      _
    // Predicated region
    $region26: #{forward.1} parent=1 // pred_check
      _
    $region27: #{forward.1} parent=1 // pred_check_branch
      %72 = sbr.rel (0) target = $region29
    $region28: #{forward.1} parent=1 // pred_region
      _
    $region29: #{forward.1} parent=1 // pred_fallthru
      _
    // Predicated region
    $region30: #{forward.1} parent=1 // pred_check
      _
    $region31: #{forward.1} parent=1 // pred_check_branch
      %74 = sbr.rel (0) target = $region33
    $region32: #{forward.1} parent=1 // pred_region
      %s76 = ssub.s32 2048, 2048
      %77 = vsyncadd [#allocation9], %s76
      %s78 = sshll.u32 [#allocation8], 4
      %s79 = int_to_ptr.vmem [resolvable:$true] %s78
      %84 = dma.hbm_to_vmem [thread:$0]  %s7, 2048, %s79, [#allocation9], 64, 64, 4
    $region33: #{forward.1} parent=1 // pred_fallthru
      _
    // Predicated region
    $region34: #{forward.1} parent=1 // pred_check
      _
    $region35: #{forward.1} parent=1 // pred_check_branch
      %86 = sbr.rel (0) target = $region37
    $region36: #{forward.1} parent=1 // pred_region
      _
    $region37: #{forward.1} parent=1 // pred_fallthru
      _
    // Predicated region
    $region38: #{forward.1} parent=1 // pred_check
      _
    $region39: #{forward.1} parent=1 // pred_check_branch
      %88 = sbr.rel (0) target = $region41
    $region40: #{forward.1} parent=1 // pred_region
      _
    $region41: #{forward.1} parent=1 // pred_fallthru
      _
    // Predicated region
    $region42: #{forward.1} parent=1 // pred_check
      _
    $region43: #{forward.1} parent=1 // pred_check_branch
      %90 = sbr.rel (0) target = $region45
    $region44: #{forward.1} parent=1 // pred_region
      _
    $region45: #{forward.1} parent=1 // pred_fallthru
      _
    // Predicated region
    $region46: #{forward.1} parent=1 // pred_check
      _
    $region47: #{forward.1} parent=1 // pred_check_branch
      %92 = sbr.rel (0) target = $region49
    $region48: #{forward.1} parent=1 // pred_region
      _
    $region49: #{forward.1} parent=1 // pred_fallthru
      _
    // Predicated region
    $region50: #{forward.1} parent=1 // pred_check
      _
    $region51: #{forward.1} parent=1 // pred_check_branch
      %94 = sbr.rel (0) target = $region53
    $region52: #{forward.1} parent=1 // pred_region
      _
    $region53: #{forward.1} parent=1 // pred_fallthru
      _
    // Predicated region
    $region54: #{forward.1} parent=1 // pred_check
      _
    $region55: #{forward.1} parent=1 // pred_check_branch
      %96 = sbr.rel (0) target = $region57
    $region56: #{forward.1} parent=1 // pred_region
      %s98 = ssub.s32 4096, 4096
      %99 = vsyncadd [#allocation9], %s98
      %s100 = sshll.u32 [#allocation10], 4
      %s101 = int_to_ptr.vmem [resolvable:$true] %s100
      %106 = dma.hbm_to_vmem [thread:$0]  %s13, 4096, %s101, [#allocation9], 64, 64, 4
    $region57: #{forward.1} parent=1 // pred_fallthru
      _
    // Predicated region
    $region58: #{forward.1} parent=1 // pred_check
      _
    $region59: #{forward.1} parent=1 // pred_check_branch
      %108 = sbr.rel (0) target = $region61
    $region60: #{forward.1} parent=1 // pred_region
      _
    $region61: #{forward.1} parent=1 // pred_fallthru
      _
    // Predicated region
    $region62: #{forward.1} parent=1 // pred_check
      _
    $region63: #{forward.1} parent=1 // pred_check_branch
      %110 = sbr.rel (0) target = $region65
    $region64: #{forward.1} parent=1 // pred_region
      _
    $region65: #{forward.1} parent=1 // pred_fallthru
      _
    // Predicated region
    $region66: #{forward.1} parent=1 // pred_check
      _
    $region67: #{forward.1} parent=1 // pred_check_branch
      %112 = sbr.rel (0) target = $region69
    $region68: #{forward.1} parent=1 // pred_region
      _
    $region69: #{forward.1} parent=1 // pred_fallthru
      _
    // Predicated region
    $region70: #{forward.1} parent=1 // pred_check
      _
    $region71: #{forward.1} parent=1 // pred_check_branch
      %114 = sbr.rel (0) target = $region73
    $region72: #{forward.1} parent=1 // pred_region
      %s116 = ssub.s32 2048, 2048
      %117 = vsyncadd [#allocation12], %s116
      %s118 = sshll.u32 [#allocation11], 4
      %s119 = int_to_ptr.vmem [resolvable:$true] %s118
      %124 = dma.hbm_to_vmem [thread:$0]  %s17, 2048, %s119, [#allocation12], 128, 128, 8
    $region73: #{forward.1} parent=1 // pred_fallthru
      _
    // Predicated region
    $region74: #{forward.1} parent=1 // pred_check
      _
    $region75: #{forward.1} parent=1 // pred_check_branch
      %126 = sbr.rel (0) target = $region77
    $region76: #{forward.1} parent=1 // pred_region
      _
    $region77: #{forward.1} parent=1 // pred_fallthru
      _
    // Predicated region
    $region78: #{forward.1} parent=1 // pred_check
      _
    $region79: #{forward.1} parent=1 // pred_check_branch
      %128 = sbr.rel (0) target = $region81
    $region80: #{forward.1} parent=1 // pred_region
      %129 = dma.done [#allocation3], 1024
    $region81: #{forward.1} parent=1 // pred_fallthru
      _
    // Predicated region
    $region82: #{forward.1} parent=1 // pred_check
      _
    $region83: #{forward.1} parent=1 // pred_check_branch
      %131 = sbr.rel (0) target = $region85
    $region84: #{forward.1} parent=1 // pred_region
      %132 = dma.done [#allocation6], 1024
    $region85: #{forward.1} parent=1 // pred_fallthru
      _
    // Predicated region
    $region86: #{forward.1} parent=1 // pred_check
      _
    $region87: #{forward.1} parent=1 // pred_check_branch
      %134 = sbr.rel (0) target = $region89
    $region88: #{forward.1} parent=1 // pred_region
      %135 = dma.done [#allocation6], 6144
    $region89: #{forward.1} parent=1 // pred_fallthru
      _
    // Predicated region
    $region90: #{forward.1} parent=1 // pred_check
      _
    $region91: #{forward.1} parent=1 // pred_check_branch
      %137 = sbr.rel (0) target = $region93
    $region92: #{forward.1} parent=1 // pred_region
      %138 = dma.done [#allocation9], 2048
    $region93: #{forward.1} parent=1 // pred_fallthru
      _
    // Predicated region
    $region94: #{forward.1} parent=1 // pred_check
      _
    $region95: #{forward.1} parent=1 // pred_check_branch
      %140 = sbr.rel (0) target = $region97
    $region96: #{forward.1} parent=1 // pred_region
      %141 = dma.done [#allocation9], 4096
    $region97: #{forward.1} parent=1 // pred_fallthru
      _
    // Predicated region
    $region98: #{forward.1} parent=1 // pred_check
      _
    $region99: #{forward.1} parent=1 // pred_check_branch
      %143 = sbr.rel (0) target = $region101
    $region100: #{forward.1} parent=1 // pred_region
      %144 = dma.done [#allocation12], 2048
    $region101: #{forward.1} parent=1 // pred_fallthru
      _
    %v146 = vld [vmem:[%s0] sm:$0xff]
    %v147 = vld [vmem:[%s0 + $0x8] sm:$0xff]
    %v148 = vld [vmem:[#allocation2] sm:$0xff]
    %v149 = vld [vmem:[#allocation2 + $0x8] sm:$0xff]
    %v150 = vld [vmem:[#allocation2 + $0x10] sm:$0xff]
    %v151 = vld [vmem:[#allocation2 + $0x18] sm:$0xff]
    %v152 = vld [vmem:[#allocation2 + $0x20] sm:$0xff]
    %v153 = vld [vmem:[#allocation2 + $0x28] sm:$0xff]
    %v154 = vld [vmem:[#allocation2 + $0x30] sm:$0xff]
    %v155 = vld [vmem:[#allocation2 + $0x38] sm:$0xff]
    %v156 = vpack.c.bf16 %v149, %v148
    %v157 = vpack.c.bf16 %v151, %v150
    %v158 = vpack.c.bf16 %v153, %v152
    %v159 = vpack.c.bf16 %v155, %v154
    %v160 = vld [vmem:[#allocation5] sm:$0xff]
    %v161 = vld [vmem:[#allocation5 + $0x8] sm:$0xff]
    %v162 = vld [vmem:[#allocation5 + $0x10] sm:$0xff]
    %v163 = vld [vmem:[#allocation5 + $0x18] sm:$0xff]
    %v164 = vld [vmem:[#allocation5 + $0x20] sm:$0xff]
    %v165 = vld [vmem:[#allocation5 + $0x28] sm:$0xff]
    %v166 = vld [vmem:[#allocation5 + $0x30] sm:$0xff]
    %v167 = vld [vmem:[#allocation5 + $0x38] sm:$0xff]
    %v168 = vld [vmem:[%s3] sm:$0x1]
    %v169 = vld [vmem:[%s4] sm:$0x1]
    %170 = vadd.xlane.f32.xlu0 %v146
    %v171 = vpop.xlane.xlu0 %170
    %172 = vadd.xlane.f32.xlu0 %v147
    %v173 = vpop.xlane.xlu0 %172
    %v174 = vrcp.pop 128.0
    %v175 = vmul.f32 %v171, %v174
    %v176 = vmul.f32 %v173, %v174
    %v177 = vmul.f32 %v146, %v146
    %v178 = vmul.f32 %v147, %v147
    %179 = vadd.xlane.f32.xlu0 %v177
    %v180 = vpop.xlane.xlu0 %179
    %181 = vadd.xlane.f32.xlu0 %v178
    %v182 = vpop.xlane.xlu0 %181
    %v183 = vmul.f32 %v180, %v174
    %v184 = vmul.f32 %v182, %v174
    %v185 = vmul.f32 %v175, %v175
    %v186 = vmul.f32 %v176, %v176
    %v187 = vsub.f32 %v183, %v185
    %v188 = vsub.f32 %v184, %v186
    %v189 = vsub.f32 %v146, %v175
    %v190 = vsub.f32 %v147, %v176
    %v191 = vadd.f32 %v187, 1e-05
    %v192 = vadd.f32 %v188, 1e-05
    %v193 = vrsqrt.pop %v191
    %v194 = vrsqrt.pop %v192
    %v195 = vmul.f32 %v189, %v193
    %v196 = vmul.f32 %v190, %v194
    %v198 = vlaneseq
    %v199 = vshrl.u32 %v198, 7
    %v200 = vsub.s32 0, %v199
    %v201 = vrot.slane %v168, %v200
    %v203 = vmul.f32 %v195, %v201
    %v204 = vmul.f32 %v196, %v201
    %v206 = vlaneseq
    %v207 = vshrl.u32 %v206, 7
    %v208 = vsub.s32 0, %v207
    %v209 = vrot.slane %v169, %v208
    %v211 = vadd.f32 %v203, %v209
    %v212 = vadd.f32 %v204, %v209
    %v213 = vpack.c.bf16 %v212, %v211
    %v214 = vld [vmem:[#allocation7] sm:$0xff]
    %v215 = vld [vmem:[#allocation7 + $0x8] sm:$0xf]
    %v216 = vld [vmem:[#allocation7 + $0xc] sm:$0xff]
    %v217 = vld [vmem:[#allocation7 + $0x14] sm:$0xf]
    %v218 = vld [vmem:[#allocation7 + $0x18] sm:$0xff]
    %v219 = vld [vmem:[#allocation7 + $0x20] sm:$0xf]
    %v220 = vld [vmem:[#allocation7 + $0x24] sm:$0xff]
    %v221 = vld [vmem:[#allocation7 + $0x2c] sm:$0xf]
    %v222 = vld [vmem:[#allocation7 + $0x30] sm:$0xff]
    %v223 = vld [vmem:[#allocation7 + $0x38] sm:$0xf]
    %v224 = vld [vmem:[#allocation7 + $0x3c] sm:$0xff]
    %v225 = vld [vmem:[#allocation7 + $0x44] sm:$0xf]
    %v226 = vld [vmem:[#allocation7 + $0x48] sm:$0xff]
    %v227 = vld [vmem:[#allocation7 + $0x50] sm:$0xf]
    %v228 = vld [vmem:[#allocation7 + $0x54] sm:$0xff]
    %v229 = vld [vmem:[#allocation7 + $0x5c] sm:$0xf]
    %v230 = vld [vmem:[#allocation7 + $0x60] sm:$0xff]
    %v231 = vld [vmem:[#allocation7 + $0x68] sm:$0xf]
    %v232 = vld [vmem:[#allocation7 + $0x6c] sm:$0xff]
    %v233 = vld [vmem:[#allocation7 + $0x74] sm:$0xf]
    %v234 = vld [vmem:[#allocation7 + $0x78] sm:$0xff]
    %v235 = vld [vmem:[#allocation7 + $0x80] sm:$0xf]
    %v236 = vld [vmem:[#allocation7 + $0x84] sm:$0xff]
    %v237 = vld [vmem:[#allocation7 + $0x8c] sm:$0xf]
    %v238 = vld [vmem:[#allocation7 + $0x90] sm:$0xff]
    %v239 = vld [vmem:[#allocation7 + $0x98] sm:$0xf]
    %v240 = vld [vmem:[#allocation7 + $0x9c] sm:$0xff]
    %v241 = vld [vmem:[#allocation7 + $0xa4] sm:$0xf]
    %v242 = vld [vmem:[#allocation7 + $0xa8] sm:$0xff]
    %v243 = vld [vmem:[#allocation7 + $0xb0] sm:$0xf]
    %v244 = vld [vmem:[#allocation7 + $0xb4] sm:$0xff]
    %v245 = vld [vmem:[#allocation7 + $0xbc] sm:$0xf]
    %v246 = vld [vmem:[%s6] sm:$0x7]
    %v248 = vlaneseq
    %v249 = vshrl.u32 %v248, 7
    %v250 = vsub.s32 0, %v249
    %v251 = vrot.slane %v246, %v250
    %v252 = vlaneseq
    %v253 = vshrl.u32 %v252, 7
    %v254 = vsub.s32 1, %v253
    %v255 = vrot.slane %v246, %v254
    %v256 = vlaneseq
    %v257 = vshrl.u32 %v256, 7
    %v258 = vsub.s32 2, %v257
    %v259 = vrot.slane %v246, %v258
    %v295 = vunpack.c.l.b16 %v214
    %v296 = vunpack.c.h.b16 %v214
    %v297 = vunpack.c.l.b16 %v215
    %v298 = vunpack.c.l.b16 %v216
    %v299 = vunpack.c.h.b16 %v216
    %v300 = vunpack.c.l.b16 %v217
    %v301 = vunpack.c.l.b16 %v218
    %v302 = vunpack.c.h.b16 %v218
    %v303 = vunpack.c.l.b16 %v219
    %v304 = vunpack.c.l.b16 %v220
    %v305 = vunpack.c.h.b16 %v220
    %v306 = vunpack.c.l.b16 %v221
    %v307 = vunpack.c.l.b16 %v222
    %v308 = vunpack.c.h.b16 %v222
    %v309 = vunpack.c.l.b16 %v223
    %v310 = vunpack.c.l.b16 %v224
    %v311 = vunpack.c.h.b16 %v224
    %v312 = vunpack.c.l.b16 %v225
    %v313 = vunpack.c.l.b16 %v226
    %v314 = vunpack.c.h.b16 %v226
    %v315 = vunpack.c.l.b16 %v227
    %v316 = vunpack.c.l.b16 %v228
    %v317 = vunpack.c.h.b16 %v228
    %v318 = vunpack.c.l.b16 %v229
    %v319 = vunpack.c.l.b16 %v230
    %v320 = vunpack.c.h.b16 %v230
    %v321 = vunpack.c.l.b16 %v231
    %v322 = vunpack.c.l.b16 %v232
    %v323 = vunpack.c.h.b16 %v232
    %v324 = vunpack.c.l.b16 %v233
    %v325 = vunpack.c.l.b16 %v234
    %v326 = vunpack.c.h.b16 %v234
    %v327 = vunpack.c.l.b16 %v235
    %v328 = vunpack.c.l.b16 %v236
    %v329 = vunpack.c.h.b16 %v236
    %v330 = vunpack.c.l.b16 %v237
    %v331 = vunpack.c.l.b16 %v238
    %v332 = vunpack.c.h.b16 %v238
    %v333 = vunpack.c.l.b16 %v239
    %v334 = vunpack.c.l.b16 %v240
    %v335 = vunpack.c.h.b16 %v240
    %v336 = vunpack.c.l.b16 %v241
    %v337 = vunpack.c.l.b16 %v242
    %v338 = vunpack.c.h.b16 %v242
    %v339 = vunpack.c.l.b16 %v243
    %v340 = vunpack.c.l.b16 %v244
    %v341 = vunpack.c.h.b16 %v244
    %v342 = vunpack.c.l.b16 %v245
    %v343 = vpack.c.b16 %v298, %v295
    %v344 = vpack.c.b16 %v299, %v296
    %v345 = vpack.c.b16 %v300, %v297
    %v346 = vpack.c.b16 %v304, %v301
    %v347 = vpack.c.b16 %v305, %v302
    %v348 = vpack.c.b16 %v306, %v303
    %v349 = vpack.c.b16 %v310, %v307
    %v350 = vpack.c.b16 %v311, %v308
    %v351 = vpack.c.b16 %v312, %v309
    %v352 = vpack.c.b16 %v316, %v313
    %v353 = vpack.c.b16 %v317, %v314
    %v354 = vpack.c.b16 %v318, %v315
    %v355 = vpack.c.b16 %v322, %v319
    %v356 = vpack.c.b16 %v323, %v320
    %v357 = vpack.c.b16 %v324, %v321
    %v358 = vpack.c.b16 %v328, %v325
    %v359 = vpack.c.b16 %v329, %v326
    %v360 = vpack.c.b16 %v330, %v327
    %v361 = vpack.c.b16 %v334, %v331
    %v362 = vpack.c.b16 %v335, %v332
    %v363 = vpack.c.b16 %v336, %v333
    %v364 = vpack.c.b16 %v340, %v337
    %v365 = vpack.c.b16 %v341, %v338
    %v366 = vpack.c.b16 %v342, %v339
    %391 = vmatprep.subr.bf16.mxu0 %v365
    %392 = vmatpush1.bf16.msra.mxu0 %v364
    %393 = vmatprep.subr.bf16.mxu0 %v362
    %394 = vmatpush1.bf16.msra.mxu0 %v361
    %395 = vmatprep.subr.bf16.mxu0 %v359
    %396 = vmatpush1.bf16.msra.mxu0 %v358
    %397 = vmatprep.subr.bf16.mxu0 %v356
    %398 = vmatpush1.bf16.msra.mxu0 %v355
    %399 = vmatprep.subr.bf16.mxu0 %v353
    %400 = vmatpush1.bf16.msra.mxu0 %v352
    %401 = vmatprep.subr.bf16.mxu0 %v350
    %402 = vmatpush1.bf16.msra.mxu0 %v349
    %403 = vmatprep.subr.bf16.mxu0 %v347
    %404 = vmatpush1.bf16.msra.mxu0 %v346
    %405 = vmatprep.subr.bf16.mxu0 %v344
    %406 = vmatpush1.bf16.msra.mxu0 %v343
    %407 = vmatprep.subr.bf16.mxu0 0
    %408 = vmatpush2.bf16.msra.mxu0 0
    %409 = vmatprep.subr.bf16.mxu0 0
    %410 = vmatpush2.bf16.msra.mxu0 0
    %411 = vmatprep.subr.bf16.mxu0 0
    %412 = vmatpush2.bf16.msra.mxu0 0
    %413 = vmatprep.subr.bf16.mxu0 0
    %414 = vmatpush2.bf16.msra.mxu0 0
    %415 = vmatprep.subr.bf16.mxu0 0
    %416 = vmatpush2.bf16.msra.mxu0 0
    %417 = vmatprep.subr.bf16.mxu0 0
    %418 = vmatpush2.bf16.msra.mxu0 0
    %419 = vmatprep.subr.bf16.mxu0 0
    %420 = vmatpush2.bf16.msra.mxu0 0
    %421 = vmatprep.subr.bf16.mxu0 0
    %422 = vmatpush2.bf16.msra.mxu0 0
    %423 = vmatprep.mubr.bf16.mxu0 0
    %424 = vmatmul.mubr.bf16.gmra.mxu0 %v213
    %v425 = vpop.f32.mrf.mxu0
    %v426 = vadd.f32 %v251, %v425
    %v427 = vpop.f32.mrf.mxu0
    %v428 = vadd.f32 %v255, %v427
    %v429 = vpop.f32.mrf.mxu0
    %v430 = vadd.f32 %v251, %v429
    %v431 = vpop.f32.mrf.mxu0
    %v432 = vadd.f32 %v255, %v431
    %433 = vdwg.mxu0
    %434 = vmatprep.subr.bf16.mxu0 0
    %435 = vmatpush1.bf16.msra.mxu0 %v366
    %436 = vmatprep.subr.bf16.mxu0 0
    %437 = vmatpush1.bf16.msra.mxu0 %v363
    %438 = vmatprep.subr.bf16.mxu0 0
    %439 = vmatpush1.bf16.msra.mxu0 %v360
    %440 = vmatprep.subr.bf16.mxu0 0
    %441 = vmatpush1.bf16.msra.mxu0 %v357
    %442 = vmatprep.subr.bf16.mxu0 0
    %443 = vmatpush1.bf16.msra.mxu0 %v354
    %444 = vmatprep.subr.bf16.mxu0 0
    %445 = vmatpush1.bf16.msra.mxu0 %v351
    %446 = vmatprep.subr.bf16.mxu0 0
    %447 = vmatpush1.bf16.msra.mxu0 %v348
    %448 = vmatprep.subr.bf16.mxu0 0
    %449 = vmatpush1.bf16.msra.mxu0 %v345
    %450 = vmatprep.subr.bf16.mxu0 0
    %451 = vmatpush2.bf16.msra.mxu0 0
    %452 = vmatprep.subr.bf16.mxu0 0
    %453 = vmatpush2.bf16.msra.mxu0 0
    %454 = vmatprep.subr.bf16.mxu0 0
    %455 = vmatpush2.bf16.msra.mxu0 0
    %456 = vmatprep.subr.bf16.mxu0 0
    %457 = vmatpush2.bf16.msra.mxu0 0
    %458 = vmatprep.subr.bf16.mxu0 0
    %459 = vmatpush2.bf16.msra.mxu0 0
    %460 = vmatprep.subr.bf16.mxu0 0
    %461 = vmatpush2.bf16.msra.mxu0 0
    %462 = vmatprep.subr.bf16.mxu0 0
    %463 = vmatpush2.bf16.msra.mxu0 0
    %464 = vmatprep.subr.bf16.mxu0 0
    %465 = vmatpush2.bf16.msra.mxu0 0
    %466 = vmatprep.mubr.bf16.mxu0 0
    %467 = vmatmul.mubr.bf16.gmra.mxu0 %v213
    %v468 = vpop.f32.mrf.mxu0
    %v469 = vadd.f32 %v259, %v468
    %v470 = vpop.f32.mrf.mxu0
    %v471 = vpop.f32.mrf.mxu0
    %v472 = vadd.f32 %v259, %v471
    %v473 = vpop.f32.mrf.mxu0
    %474 = vdwg.mxu0
    %v475 = vpack.c.bf16 %v430, %v426
    %v476 = vpack.c.bf16 %v432, %v428
    %v477 = vpack.c.bf16 %v472, %v469
    %v478 = vmul.bf16 %v475, %v156
    %v479 = vmul.bf16 %v475, %v157
    %v480 = vmul.bf16 %v475, %v158
    %v481 = vmul.bf16 %v475, %v159
    %482 = vmatprep.subr.bf16.mxu0 0
    %483 = vmatpush1.bf16.xpose.msra.mxu0 0
    %484 = vmatprep.subr.bf16.mxu0 0
    %485 = vmatpush1.bf16.xpose.msra.mxu0 0
    %486 = vmatprep.subr.bf16.mxu0 0
    %487 = vmatpush1.bf16.xpose.msra.mxu0 0
    %488 = vmatprep.subr.bf16.mxu0 0
    %489 = vmatpush1.bf16.xpose.msra.mxu0 0
    %490 = vmatprep.subr.bf16.mxu0 0
    %491 = vmatpush1.bf16.xpose.msra.mxu0 0
    %492 = vmatprep.subr.bf16.mxu0 0
    %493 = vmatpush1.bf16.xpose.msra.mxu0 0
    %494 = vmatprep.subr.bf16.mxu0 0
    %495 = vmatpush1.bf16.xpose.msra.mxu0 0
    %496 = vmatprep.subr.bf16.mxu0 0
    %497 = vmatpush1.bf16.xpose.msra.mxu0 %v476
    %498 = vmatprep.subr.bf16.mxu0 0
    %499 = vmatpush2.bf16.xpose.msra.mxu0 0
    %500 = vmatprep.subr.bf16.mxu0 0
    %501 = vmatpush2.bf16.xpose.msra.mxu0 0
    %502 = vmatprep.subr.bf16.mxu0 0
    %503 = vmatpush2.bf16.xpose.msra.mxu0 0
    %504 = vmatprep.subr.bf16.mxu0 0
    %505 = vmatpush2.bf16.xpose.msra.mxu0 0
    %506 = vmatprep.subr.bf16.mxu0 0
    %507 = vmatpush2.bf16.xpose.msra.mxu0 0
    %508 = vmatprep.subr.bf16.mxu0 0
    %509 = vmatpush2.bf16.xpose.msra.mxu0 0
    %510 = vmatprep.subr.bf16.mxu0 0
    %511 = vmatpush2.bf16.xpose.msra.mxu0 0
    %512 = vmatprep.subr.bf16.mxu0 0
    %513 = vmatpush2.bf16.xpose.msra.mxu0 0
    %514 = vmatprep.mubr.bf16.mxu0 0
    %515 = vmatmul.mubr.bf16.gmra.mxu0 %v478
    %v516 = vpop.f32.mrf.mxu0
    %v517 = vadd.f32 0.0, %v516
    %v518 = vpop.f32.mrf.mxu0
    %v519 = vpop.f32.mrf.mxu0
    %v520 = vadd.f32 0.0, %v519
    %v521 = vpop.f32.mrf.mxu0
    %522 = vmatprep.mubr.bf16.mxu0 0
    %523 = vmatmul.mubr.bf16.gmra.mxu0 %v479
    %v524 = vpop.f32.mrf.mxu0
    %v525 = vadd.f32 0.0, %v524
    %v526 = vpop.f32.mrf.mxu0
    %v527 = vpop.f32.mrf.mxu0
    %v528 = vadd.f32 0.0, %v527
    %v529 = vpop.f32.mrf.mxu0
    %530 = vmatprep.mubr.bf16.mxu0 0
    %531 = vmatmul.mubr.bf16.gmra.mxu0 %v480
    %v532 = vpop.f32.mrf.mxu0
    %v533 = vadd.f32 0.0, %v532
    %v534 = vpop.f32.mrf.mxu0
    %v535 = vpop.f32.mrf.mxu0
    %v536 = vadd.f32 0.0, %v535
    %v537 = vpop.f32.mrf.mxu0
    %538 = vmatprep.mubr.bf16.mxu0 0
    %539 = vmatmul.mubr.bf16.gmra.mxu0 %v481
    %v540 = vpop.f32.mrf.mxu0
    %v541 = vadd.f32 0.0, %v540
    %v542 = vpop.f32.mrf.mxu0
    %v543 = vpop.f32.mrf.mxu0
    %v544 = vadd.f32 0.0, %v543
    %v545 = vpop.f32.mrf.mxu0
    %546 = vdwg.mxu0
    %v547 = vmul.f32 %v517, 0.17677669
    %v548 = vmul.f32 %v520, 0.17677669
    %v549 = vmul.f32 %v525, 0.17677669
    %v550 = vmul.f32 %v528, 0.17677669
    %v551 = vmul.f32 %v533, 0.17677669
    %v552 = vmul.f32 %v536, 0.17677669
    %v553 = vmul.f32 %v541, 0.17677669
    %v554 = vmul.f32 %v544, 0.17677669
    %v555 = vadd.f32 %v547, %v160
    %v556 = vadd.f32 %v548, %v161
    %v557 = vadd.f32 %v549, %v162
    %v558 = vadd.f32 %v550, %v163
    %v559 = vadd.f32 %v551, %v164
    %v560 = vadd.f32 %v552, %v165
    %v561 = vadd.f32 %v553, %v166
    %v562 = vadd.f32 %v554, %v167
    %vm563 = vcmask 130048
    %v564 = vsel %vm563, %v555, -inf
    %565 = vmax.xlane.f32.xlu0 %v564
    %v566 = vpop.xlane.xlu0 %565
    %v567 = vsel %vm563, %v556, -inf
    %568 = vmax.xlane.f32.xlu0 %v567
    %v569 = vpop.xlane.xlu0 %568
    %v570 = vsel %vm563, %v557, -inf
    %571 = vmax.xlane.f32.xlu0 %v570
    %v572 = vpop.xlane.xlu0 %571
    %v573 = vsel %vm563, %v558, -inf
    %574 = vmax.xlane.f32.xlu0 %v573
    %v575 = vpop.xlane.xlu0 %574
    %v576 = vsel %vm563, %v559, -inf
    %577 = vmax.xlane.f32.xlu0 %v576
    %v578 = vpop.xlane.xlu0 %577
    %v579 = vsel %vm563, %v560, -inf
    %580 = vmax.xlane.f32.xlu0 %v579
    %v581 = vpop.xlane.xlu0 %580
    %v582 = vsel %vm563, %v561, -inf
    %583 = vmax.xlane.f32.xlu0 %v582
    %v584 = vpop.xlane.xlu0 %583
    %v585 = vsel %vm563, %v562, -inf
    %586 = vmax.xlane.f32.xlu0 %v585
    %v587 = vpop.xlane.xlu0 %586
    %v588 = vsub.f32 %v555, %v566
    %v589 = vsub.f32 %v556, %v569
    %v590 = vsub.f32 %v557, %v572
    %v591 = vsub.f32 %v558, %v575
    %v592 = vsub.f32 %v559, %v578
    %v593 = vsub.f32 %v560, %v581
    %v594 = vsub.f32 %v561, %v584
    %v595 = vsub.f32 %v562, %v587
    %v596 = vmul.f32 %v588, 1.442695
    %v597 = vpow.pop %v596
    %v598 = vmul.f32 %v589, 1.442695
    %v599 = vpow.pop %v598
    %v600 = vmul.f32 %v590, 1.442695
    %v601 = vpow.pop %v600
    %v602 = vmul.f32 %v591, 1.442695
    %v603 = vpow.pop %v602
    %v604 = vmul.f32 %v592, 1.442695
    %v605 = vpow.pop %v604
    %v606 = vmul.f32 %v593, 1.442695
    %v607 = vpow.pop %v606
    %v608 = vmul.f32 %v594, 1.442695
    %v609 = vpow.pop %v608
    %v610 = vmul.f32 %v595, 1.442695
    %v611 = vpow.pop %v610
    %v612 = vsel %vm563, %v597, 0.0
    %613 = vadd.xlane.f32.xlu0 %v612
    %v614 = vpop.xlane.xlu0 %613
    %v615 = vsel %vm563, %v599, 0.0
    %616 = vadd.xlane.f32.xlu0 %v615
    %v617 = vpop.xlane.xlu0 %616
    %v618 = vsel %vm563, %v601, 0.0
    %619 = vadd.xlane.f32.xlu0 %v618
    %v620 = vpop.xlane.xlu0 %619
    %v621 = vsel %vm563, %v603, 0.0
    %622 = vadd.xlane.f32.xlu0 %v621
    %v623 = vpop.xlane.xlu0 %622
    %v624 = vsel %vm563, %v605, 0.0
    %625 = vadd.xlane.f32.xlu0 %v624
    %v626 = vpop.xlane.xlu0 %625
    %v627 = vsel %vm563, %v607, 0.0
    %628 = vadd.xlane.f32.xlu0 %v627
    %v629 = vpop.xlane.xlu0 %628
    %v630 = vsel %vm563, %v609, 0.0
    %631 = vadd.xlane.f32.xlu0 %v630
    %v632 = vpop.xlane.xlu0 %631
    %v633 = vsel %vm563, %v611, 0.0
    %634 = vadd.xlane.f32.xlu0 %v633
    %v635 = vpop.xlane.xlu0 %634
    %v636 = vrcp.pop %v614
    %v637 = vrcp.pop %v617
    %v638 = vrcp.pop %v620
    %v639 = vrcp.pop %v623
    %v640 = vrcp.pop %v626
    %v641 = vrcp.pop %v629
    %v642 = vrcp.pop %v632
    %v643 = vrcp.pop %v635
    %v644 = vmul.f32 %v597, %v636
    %v645 = vmul.f32 %v599, %v637
    %v646 = vmul.f32 %v601, %v638
    %v647 = vmul.f32 %v603, %v639
    %v648 = vmul.f32 %v605, %v640
    %v649 = vmul.f32 %v607, %v641
    %v650 = vmul.f32 %v609, %v642
    %v651 = vmul.f32 %v611, %v643
    %v652 = vpack.c.bf16 %v645, %v644
    %v653 = vpack.c.bf16 %v647, %v646
    %v654 = vpack.c.bf16 %v649, %v648
    %v655 = vpack.c.bf16 %v651, %v650
    %v657 = vsel %vm563, %v652, 0
    %v660 = vsel %vm563, %v653, 0
    %v663 = vsel %vm563, %v654, 0
    %v666 = vsel %vm563, %v655, 0
    %668 = vmatprep.subr.bf16.mxu0 0
    %669 = vmatpush1.bf16.msra.mxu0 0
    %670 = vmatprep.subr.bf16.mxu0 0
    %671 = vmatpush1.bf16.msra.mxu0 0
    %672 = vmatprep.subr.bf16.mxu0 0
    %673 = vmatpush1.bf16.msra.mxu0 0
    %674 = vmatprep.subr.bf16.mxu0 0
    %675 = vmatpush1.bf16.msra.mxu0 0
    %676 = vmatprep.subr.bf16.mxu0 0
    %677 = vmatpush1.bf16.msra.mxu0 0
    %678 = vmatprep.subr.bf16.mxu0 0
    %679 = vmatpush1.bf16.msra.mxu0 0
    %680 = vmatprep.subr.bf16.mxu0 0
    %681 = vmatpush1.bf16.msra.mxu0 0
    %682 = vmatprep.subr.bf16.mxu0 0
    %683 = vmatpush1.bf16.msra.mxu0 %v477
    %684 = vmatprep.subr.bf16.mxu0 0
    %685 = vmatpush2.bf16.msra.mxu0 0
    %686 = vmatprep.subr.bf16.mxu0 0
    %687 = vmatpush2.bf16.msra.mxu0 0
    %688 = vmatprep.subr.bf16.mxu0 0
    %689 = vmatpush2.bf16.msra.mxu0 0
    %690 = vmatprep.subr.bf16.mxu0 0
    %691 = vmatpush2.bf16.msra.mxu0 0
    %692 = vmatprep.subr.bf16.mxu0 0
    %693 = vmatpush2.bf16.msra.mxu0 0
    %694 = vmatprep.subr.bf16.mxu0 0
    %695 = vmatpush2.bf16.msra.mxu0 0
    %696 = vmatprep.subr.bf16.mxu0 0
    %697 = vmatpush2.bf16.msra.mxu0 0
    %698 = vmatprep.subr.bf16.mxu0 0
    %699 = vmatpush2.bf16.msra.mxu0 0
    %700 = vmatprep.mubr.bf16.mxu0 0
    %701 = vmatmul.mubr.bf16.gmra.mxu0 %v657
    %v702 = vpop.f32.mrf.mxu0
    %v703 = vadd.f32 0.0, %v702
    %v704 = vpop.f32.mrf.mxu0
    %v705 = vpop.f32.mrf.mxu0
    %v706 = vadd.f32 0.0, %v705
    %v707 = vpop.f32.mrf.mxu0
    %708 = vmatprep.mubr.bf16.mxu0 0
    %709 = vmatmul.mubr.bf16.gmra.mxu0 %v660
    %v710 = vpop.f32.mrf.mxu0
    %v711 = vadd.f32 0.0, %v710
    %v712 = vpop.f32.mrf.mxu0
    %v713 = vpop.f32.mrf.mxu0
    %v714 = vadd.f32 0.0, %v713
    %v715 = vpop.f32.mrf.mxu0
    %716 = vmatprep.mubr.bf16.mxu0 0
    %717 = vmatmul.mubr.bf16.gmra.mxu0 %v663
    %v718 = vpop.f32.mrf.mxu0
    %v719 = vadd.f32 0.0, %v718
    %v720 = vpop.f32.mrf.mxu0
    %v721 = vpop.f32.mrf.mxu0
    %v722 = vadd.f32 0.0, %v721
    %v723 = vpop.f32.mrf.mxu0
    %724 = vmatprep.mubr.bf16.mxu0 0
    %725 = vmatmul.mubr.bf16.gmra.mxu0 %v666
    %v726 = vpop.f32.mrf.mxu0
    %v727 = vadd.f32 0.0, %v726
    %v728 = vpop.f32.mrf.mxu0
    %v729 = vpop.f32.mrf.mxu0
    %v730 = vadd.f32 0.0, %v729
    %v731 = vpop.f32.mrf.mxu0
    %732 = vdwg.mxu0
    %v733 = vmul.f32 %v703, %v148
    %v734 = vmul.f32 %v706, %v149
    %v735 = vmul.f32 %v711, %v150
    %v736 = vmul.f32 %v714, %v151
    %v737 = vadd.f32 %v733, %v735
    %v738 = vadd.f32 %v734, %v736
    %v739 = vmul.f32 %v719, %v152
    %v740 = vmul.f32 %v722, %v153
    %v741 = vadd.f32 %v737, %v739
    %v742 = vadd.f32 %v738, %v740
    %v743 = vmul.f32 %v727, %v154
    %v744 = vmul.f32 %v730, %v155
    %v745 = vadd.f32 %v741, %v743
    %v746 = vadd.f32 %v742, %v744
    %v747 = vpack.c.bf16 %v746, %v745
    %v748 = vld [vmem:[#allocation8] sm:$0xf]
    %v749 = vld [vmem:[#allocation8 + $0x4] sm:$0xf]
    %v750 = vld [vmem:[#allocation8 + $0x8] sm:$0xf]
    %v751 = vld [vmem:[#allocation8 + $0xc] sm:$0xf]
    %v752 = vld [vmem:[#allocation8 + $0x10] sm:$0xf]
    %v753 = vld [vmem:[#allocation8 + $0x14] sm:$0xf]
    %v754 = vld [vmem:[#allocation8 + $0x18] sm:$0xf]
    %v755 = vld [vmem:[#allocation8 + $0x1c] sm:$0xf]
    %v756 = vld [vmem:[#allocation8 + $0x20] sm:$0xf]
    %v757 = vld [vmem:[#allocation8 + $0x24] sm:$0xf]
    %v758 = vld [vmem:[#allocation8 + $0x28] sm:$0xf]
    %v759 = vld [vmem:[#allocation8 + $0x2c] sm:$0xf]
    %v760 = vld [vmem:[#allocation8 + $0x30] sm:$0xf]
    %v761 = vld [vmem:[#allocation8 + $0x34] sm:$0xf]
    %v762 = vld [vmem:[#allocation8 + $0x38] sm:$0xf]
    %v763 = vld [vmem:[#allocation8 + $0x3c] sm:$0xf]
    %v780 = vunpack.c.l.b16 %v748
    %v781 = vunpack.c.l.b16 %v749
    %v782 = vunpack.c.l.b16 %v750
    %v783 = vunpack.c.l.b16 %v751
    %v784 = vunpack.c.l.b16 %v752
    %v785 = vunpack.c.l.b16 %v753
    %v786 = vunpack.c.l.b16 %v754
    %v787 = vunpack.c.l.b16 %v755
    %v788 = vunpack.c.l.b16 %v756
    %v789 = vunpack.c.l.b16 %v757
    %v790 = vunpack.c.l.b16 %v758
    %v791 = vunpack.c.l.b16 %v759
    %v792 = vunpack.c.l.b16 %v760
    %v793 = vunpack.c.l.b16 %v761
    %v794 = vunpack.c.l.b16 %v762
    %v795 = vunpack.c.l.b16 %v763
    %v796 = vpack.c.b16 %v781, %v780
    %v797 = vpack.c.b16 %v783, %v782
    %v798 = vpack.c.b16 %v785, %v784
    %v799 = vpack.c.b16 %v787, %v786
    %v800 = vpack.c.b16 %v789, %v788
    %v801 = vpack.c.b16 %v791, %v790
    %v802 = vpack.c.b16 %v793, %v792
    %v803 = vpack.c.b16 %v795, %v794
    %812 = vmatprep.subr.bf16.mxu0 0
    %813 = vmatpush1.bf16.msra.mxu0 %v803
    %814 = vmatprep.subr.bf16.mxu0 0
    %815 = vmatpush1.bf16.msra.mxu0 %v802
    %816 = vmatprep.subr.bf16.mxu0 0
    %817 = vmatpush1.bf16.msra.mxu0 %v801
    %818 = vmatprep.subr.bf16.mxu0 0
    %819 = vmatpush1.bf16.msra.mxu0 %v800
    %820 = vmatprep.subr.bf16.mxu0 0
    %821 = vmatpush1.bf16.msra.mxu0 %v799
    %822 = vmatprep.subr.bf16.mxu0 0
    %823 = vmatpush1.bf16.msra.mxu0 %v798
    %824 = vmatprep.subr.bf16.mxu0 0
    %825 = vmatpush1.bf16.msra.mxu0 %v797
    %826 = vmatprep.subr.bf16.mxu0 0
    %827 = vmatpush1.bf16.msra.mxu0 %v796
    %828 = vmatprep.subr.bf16.mxu0 0
    %829 = vmatpush2.bf16.msra.mxu0 0
    %830 = vmatprep.subr.bf16.mxu0 0
    %831 = vmatpush2.bf16.msra.mxu0 0
    %832 = vmatprep.subr.bf16.mxu0 0
    %833 = vmatpush2.bf16.msra.mxu0 0
    %834 = vmatprep.subr.bf16.mxu0 0
    %835 = vmatpush2.bf16.msra.mxu0 0
    %836 = vmatprep.subr.bf16.mxu0 0
    %837 = vmatpush2.bf16.msra.mxu0 0
    %838 = vmatprep.subr.bf16.mxu0 0
    %839 = vmatpush2.bf16.msra.mxu0 0
    %840 = vmatprep.subr.bf16.mxu0 0
    %841 = vmatpush2.bf16.msra.mxu0 0
    %842 = vmatprep.subr.bf16.mxu0 0
    %843 = vmatpush2.bf16.msra.mxu0 0
    %844 = vmatprep.mubr.bf16.mxu0 0
    %845 = vmatmul.mubr.bf16.gmra.mxu0 %v747
    %v846 = vpop.f32.mrf.mxu0
    %v847 = vadd.f32 0.0, %v846
    %v848 = vpop.f32.mrf.mxu0
    %v849 = vpop.f32.mrf.mxu0
    %v850 = vadd.f32 0.0, %v849
    %v851 = vpop.f32.mrf.mxu0
    %852 = vdwg.mxu0
    %v853 = vadd.f32 %v146, %v847
    %v854 = vadd.f32 %v147, %v850
    %v855 = vld [vmem:[%s8] sm:$0x1]
    %v857 = vlaneseq
    %v858 = vshrl.u32 %v857, 7
    %v859 = vsub.s32 0, %v858
    %v860 = vrot.slane %v855, %v859
    %v862 = vadd.f32 %v853, %v860
    %v863 = vadd.f32 %v854, %v860
    %v864 = vld [vmem:[%s9] sm:$0x1]
    %v865 = vld [vmem:[%s10] sm:$0x1]
    %866 = vadd.xlane.f32.xlu0 %v862
    %v867 = vpop.xlane.xlu0 %866
    %868 = vadd.xlane.f32.xlu0 %v863
    %v869 = vpop.xlane.xlu0 %868
    %v870 = vmul.f32 %v867, %v174
    %v871 = vmul.f32 %v869, %v174
    %v872 = vmul.f32 %v862, %v862
    %v873 = vmul.f32 %v863, %v863
    %874 = vadd.xlane.f32.xlu0 %v872
    %v875 = vpop.xlane.xlu0 %874
    %876 = vadd.xlane.f32.xlu0 %v873
    %v877 = vpop.xlane.xlu0 %876
    %v878 = vmul.f32 %v875, %v174
    %v879 = vmul.f32 %v877, %v174
    %v880 = vmul.f32 %v870, %v870
    %v881 = vmul.f32 %v871, %v871
    %v882 = vsub.f32 %v878, %v880
    %v883 = vsub.f32 %v879, %v881
    %v884 = vsub.f32 %v862, %v870
    %v885 = vsub.f32 %v863, %v871
    %v886 = vadd.f32 %v882, 1e-05
    %v887 = vadd.f32 %v883, 1e-05
    %v888 = vrsqrt.pop %v886
    %v889 = vrsqrt.pop %v887
    %v890 = vmul.f32 %v884, %v888
    %v891 = vmul.f32 %v885, %v889
    %v893 = vlaneseq
    %v894 = vshrl.u32 %v893, 7
    %v895 = vsub.s32 0, %v894
    %v896 = vrot.slane %v864, %v895
    %v898 = vmul.f32 %v890, %v896
    %v899 = vmul.f32 %v891, %v896
    %v901 = vlaneseq
    %v902 = vshrl.u32 %v901, 7
    %v903 = vsub.s32 0, %v902
    %v904 = vrot.slane %v865, %v903
    %v906 = vadd.f32 %v898, %v904
    %v907 = vadd.f32 %v899, %v904
    %v908 = vpack.c.bf16 %v907, %v906
    %v909 = vld [vmem:[%s11] sm:$0xff]
    %v910 = vld [vmem:[%s11 + $0x8] sm:$0xff]
    %v911 = vld [vmem:[%s11 + $0x10] sm:$0xff]
    %v912 = vld [vmem:[%s11 + $0x18] sm:$0xff]
    %v913 = vld [vmem:[%s11 + $0x20] sm:$0xff]
    %v914 = vld [vmem:[%s11 + $0x28] sm:$0xff]
    %v915 = vld [vmem:[%s11 + $0x30] sm:$0xff]
    %v916 = vld [vmem:[%s11 + $0x38] sm:$0xff]
    %v917 = vld [vmem:[%s11 + $0x40] sm:$0xff]
    %v918 = vld [vmem:[%s11 + $0x48] sm:$0xff]
    %v919 = vld [vmem:[%s11 + $0x50] sm:$0xff]
    %v920 = vld [vmem:[%s11 + $0x58] sm:$0xff]
    %v921 = vld [vmem:[%s11 + $0x60] sm:$0xff]
    %v922 = vld [vmem:[%s11 + $0x68] sm:$0xff]
    %v923 = vld [vmem:[%s11 + $0x70] sm:$0xff]
    %v924 = vld [vmem:[%s11 + $0x78] sm:$0xff]
    %v925 = vld [vmem:[%s12] sm:$0x3]
    %v927 = vlaneseq
    %v928 = vshrl.u32 %v927, 7
    %v929 = vsub.s32 0, %v928
    %v930 = vrot.slane %v925, %v929
    %v931 = vlaneseq
    %v932 = vshrl.u32 %v931, 7
    %v933 = vsub.s32 1, %v932
    %v934 = vrot.slane %v925, %v933
    %v953 = vunpack.c.l.b16 %v909
    %v954 = vunpack.c.h.b16 %v909
    %v955 = vunpack.c.l.b16 %v910
    %v956 = vunpack.c.h.b16 %v910
    %v957 = vunpack.c.l.b16 %v911
    %v958 = vunpack.c.h.b16 %v911
    %v959 = vunpack.c.l.b16 %v912
    %v960 = vunpack.c.h.b16 %v912
    %v961 = vunpack.c.l.b16 %v913
    %v962 = vunpack.c.h.b16 %v913
    %v963 = vunpack.c.l.b16 %v914
    %v964 = vunpack.c.h.b16 %v914
    %v965 = vunpack.c.l.b16 %v915
    %v966 = vunpack.c.h.b16 %v915
    %v967 = vunpack.c.l.b16 %v916
    %v968 = vunpack.c.h.b16 %v916
    %v969 = vunpack.c.l.b16 %v917
    %v970 = vunpack.c.h.b16 %v917
    %v971 = vunpack.c.l.b16 %v918
    %v972 = vunpack.c.h.b16 %v918
    %v973 = vunpack.c.l.b16 %v919
    %v974 = vunpack.c.h.b16 %v919
    %v975 = vunpack.c.l.b16 %v920
    %v976 = vunpack.c.h.b16 %v920
    %v977 = vunpack.c.l.b16 %v921
    %v978 = vunpack.c.h.b16 %v921
    %v979 = vunpack.c.l.b16 %v922
    %v980 = vunpack.c.h.b16 %v922
    %v981 = vunpack.c.l.b16 %v923
    %v982 = vunpack.c.h.b16 %v923
    %v983 = vunpack.c.l.b16 %v924
    %v984 = vunpack.c.h.b16 %v924
    %v985 = vpack.c.b16 %v955, %v953
    %v986 = vpack.c.b16 %v956, %v954
    %v987 = vpack.c.b16 %v959, %v957
    %v988 = vpack.c.b16 %v960, %v958
    %v989 = vpack.c.b16 %v963, %v961
    %v990 = vpack.c.b16 %v964, %v962
    %v991 = vpack.c.b16 %v967, %v965
    %v992 = vpack.c.b16 %v968, %v966
    %v993 = vpack.c.b16 %v971, %v969
    %v994 = vpack.c.b16 %v972, %v970
    %v995 = vpack.c.b16 %v975, %v973
    %v996 = vpack.c.b16 %v976, %v974
    %v997 = vpack.c.b16 %v979, %v977
    %v998 = vpack.c.b16 %v980, %v978
    %v999 = vpack.c.b16 %v983, %v981
    %v1000 = vpack.c.b16 %v984, %v982
    %1017 = vmatprep.subr.bf16.mxu0 %v1000
    %1018 = vmatpush1.bf16.msra.mxu0 %v999
    %1019 = vmatprep.subr.bf16.mxu0 %v998
    %1020 = vmatpush1.bf16.msra.mxu0 %v997
    %1021 = vmatprep.subr.bf16.mxu0 %v996
    %1022 = vmatpush1.bf16.msra.mxu0 %v995
    %1023 = vmatprep.subr.bf16.mxu0 %v994
    %1024 = vmatpush1.bf16.msra.mxu0 %v993
    %1025 = vmatprep.subr.bf16.mxu0 %v992
    %1026 = vmatpush1.bf16.msra.mxu0 %v991
    %1027 = vmatprep.subr.bf16.mxu0 %v990
    %1028 = vmatpush1.bf16.msra.mxu0 %v989
    %1029 = vmatprep.subr.bf16.mxu0 %v988
    %1030 = vmatpush1.bf16.msra.mxu0 %v987
    %1031 = vmatprep.subr.bf16.mxu0 %v986
    %1032 = vmatpush1.bf16.msra.mxu0 %v985
    %1033 = vmatprep.subr.bf16.mxu0 0
    %1034 = vmatpush2.bf16.msra.mxu0 0
    %1035 = vmatprep.subr.bf16.mxu0 0
    %1036 = vmatpush2.bf16.msra.mxu0 0
    %1037 = vmatprep.subr.bf16.mxu0 0
    %1038 = vmatpush2.bf16.msra.mxu0 0
    %1039 = vmatprep.subr.bf16.mxu0 0
    %1040 = vmatpush2.bf16.msra.mxu0 0
    %1041 = vmatprep.subr.bf16.mxu0 0
    %1042 = vmatpush2.bf16.msra.mxu0 0
    %1043 = vmatprep.subr.bf16.mxu0 0
    %1044 = vmatpush2.bf16.msra.mxu0 0
    %1045 = vmatprep.subr.bf16.mxu0 0
    %1046 = vmatpush2.bf16.msra.mxu0 0
    %1047 = vmatprep.subr.bf16.mxu0 0
    %1048 = vmatpush2.bf16.msra.mxu0 0
    %1049 = vmatprep.mubr.bf16.mxu0 0
    %1050 = vmatmul.mubr.bf16.gmra.mxu0 %v908
    %v1051 = vpop.f32.mrf.mxu0
    %v1052 = vadd.f32 %v930, %v1051
    %v1053 = vpop.f32.mrf.mxu0
    %v1054 = vadd.f32 %v934, %v1053
    %v1055 = vpop.f32.mrf.mxu0
    %v1056 = vadd.f32 %v930, %v1055
    %v1057 = vpop.f32.mrf.mxu0
    %v1058 = vadd.f32 %v934, %v1057
    %1059 = vdwg.mxu0
    %v1060 = vmul.f32 %v1052, %v1052
    %v1061 = vmul.f32 %v1054, %v1054
    %v1062 = vmul.f32 %v1056, %v1056
    %v1063 = vmul.f32 %v1058, %v1058
    %v1064 = vmul.f32 %v1052, %v1060
    %v1065 = vmul.f32 %v1054, %v1061
    %v1066 = vmul.f32 %v1056, %v1062
    %v1067 = vmul.f32 %v1058, %v1063
    %v1068 = vmul.f32 %v1064, 0.044715
    %v1069 = vmul.f32 %v1065, 0.044715
    %v1070 = vmul.f32 %v1066, 0.044715
    %v1071 = vmul.f32 %v1067, 0.044715
    %v1072 = vadd.f32 %v1052, %v1068
    %v1073 = vadd.f32 %v1054, %v1069
    %v1074 = vadd.f32 %v1056, %v1070
    %v1075 = vadd.f32 %v1058, %v1071
    %v1076 = vmul.f32 %v1072, 0.7978846
    %v1077 = vmul.f32 %v1073, 0.7978846
    %v1078 = vmul.f32 %v1074, 0.7978846
    %v1079 = vmul.f32 %v1075, 0.7978846
    %v1080 = vtanh.pop %v1076
    %v1081 = vtanh.pop %v1077
    %v1082 = vtanh.pop %v1078
    %v1083 = vtanh.pop %v1079
    %v1084 = vadd.f32 %v1080, 1.0
    %v1085 = vadd.f32 %v1081, 1.0
    %v1086 = vadd.f32 %v1082, 1.0
    %v1087 = vadd.f32 %v1083, 1.0
    %v1088 = vmul.f32 %v1084, 0.5
    %v1089 = vmul.f32 %v1085, 0.5
    %v1090 = vmul.f32 %v1086, 0.5
    %v1091 = vmul.f32 %v1087, 0.5
    %v1092 = vmul.f32 %v1052, %v1088
    %v1093 = vmul.f32 %v1054, %v1089
    %v1094 = vmul.f32 %v1056, %v1090
    %v1095 = vmul.f32 %v1058, %v1091
    %v1096 = vpack.c.bf16 %v1094, %v1092
    %v1097 = vpack.c.bf16 %v1095, %v1093
    %v1098 = vld [vmem:[#allocation10] sm:$0xf]
    %v1099 = vld [vmem:[#allocation10 + $0x4] sm:$0xf]
    %v1100 = vld [vmem:[#allocation10 + $0x8] sm:$0xf]
    %v1101 = vld [vmem:[#allocation10 + $0xc] sm:$0xf]
    %v1102 = vld [vmem:[#allocation10 + $0x10] sm:$0xf]
    %v1103 = vld [vmem:[#allocation10 + $0x14] sm:$0xf]
    %v1104 = vld [vmem:[#allocation10 + $0x18] sm:$0xf]
    %v1105 = vld [vmem:[#allocation10 + $0x1c] sm:$0xf]
    %v1106 = vld [vmem:[#allocation10 + $0x20] sm:$0xf]
    %v1107 = vld [vmem:[#allocation10 + $0x24] sm:$0xf]
    %v1108 = vld [vmem:[#allocation10 + $0x28] sm:$0xf]
    %v1109 = vld [vmem:[#allocation10 + $0x2c] sm:$0xf]
    %v1110 = vld [vmem:[#allocation10 + $0x30] sm:$0xf]
    %v1111 = vld [vmem:[#allocation10 + $0x34] sm:$0xf]
    %v1112 = vld [vmem:[#allocation10 + $0x38] sm:$0xf]
    %v1113 = vld [vmem:[#allocation10 + $0x3c] sm:$0xf]
    %v1114 = vld [vmem:[#allocation10 + $0x40] sm:$0xf]
    %v1115 = vld [vmem:[#allocation10 + $0x44] sm:$0xf]
    %v1116 = vld [vmem:[#allocation10 + $0x48] sm:$0xf]
    %v1117 = vld [vmem:[#allocation10 + $0x4c] sm:$0xf]
    %v1118 = vld [vmem:[#allocation10 + $0x50] sm:$0xf]
    %v1119 = vld [vmem:[#allocation10 + $0x54] sm:$0xf]
    %v1120 = vld [vmem:[#allocation10 + $0x58] sm:$0xf]
    %v1121 = vld [vmem:[#allocation10 + $0x5c] sm:$0xf]
    %v1122 = vld [vmem:[#allocation10 + $0x60] sm:$0xf]
    %v1123 = vld [vmem:[#allocation10 + $0x64] sm:$0xf]
    %v1124 = vld [vmem:[#allocation10 + $0x68] sm:$0xf]
    %v1125 = vld [vmem:[#allocation10 + $0x6c] sm:$0xf]
    %v1126 = vld [vmem:[#allocation10 + $0x70] sm:$0xf]
    %v1127 = vld [vmem:[#allocation10 + $0x74] sm:$0xf]
    %v1128 = vld [vmem:[#allocation10 + $0x78] sm:$0xf]
    %v1129 = vld [vmem:[#allocation10 + $0x7c] sm:$0xf]
    %v1162 = vunpack.c.l.b16 %v1098
    %v1163 = vunpack.c.l.b16 %v1099
    %v1164 = vunpack.c.l.b16 %v1100
    %v1165 = vunpack.c.l.b16 %v1101
    %v1166 = vunpack.c.l.b16 %v1102
    %v1167 = vunpack.c.l.b16 %v1103
    %v1168 = vunpack.c.l.b16 %v1104
    %v1169 = vunpack.c.l.b16 %v1105
    %v1170 = vunpack.c.l.b16 %v1106
    %v1171 = vunpack.c.l.b16 %v1107
    %v1172 = vunpack.c.l.b16 %v1108
    %v1173 = vunpack.c.l.b16 %v1109
    %v1174 = vunpack.c.l.b16 %v1110
    %v1175 = vunpack.c.l.b16 %v1111
    %v1176 = vunpack.c.l.b16 %v1112
    %v1177 = vunpack.c.l.b16 %v1113
    %v1178 = vunpack.c.l.b16 %v1114
    %v1179 = vunpack.c.l.b16 %v1115
    %v1180 = vunpack.c.l.b16 %v1116
    %v1181 = vunpack.c.l.b16 %v1117
    %v1182 = vunpack.c.l.b16 %v1118
    %v1183 = vunpack.c.l.b16 %v1119
    %v1184 = vunpack.c.l.b16 %v1120
    %v1185 = vunpack.c.l.b16 %v1121
    %v1186 = vunpack.c.l.b16 %v1122
    %v1187 = vunpack.c.l.b16 %v1123
    %v1188 = vunpack.c.l.b16 %v1124
    %v1189 = vunpack.c.l.b16 %v1125
    %v1190 = vunpack.c.l.b16 %v1126
    %v1191 = vunpack.c.l.b16 %v1127
    %v1192 = vunpack.c.l.b16 %v1128
    %v1193 = vunpack.c.l.b16 %v1129
    %v1194 = vpack.c.b16 %v1163, %v1162
    %v1195 = vpack.c.b16 %v1165, %v1164
    %v1196 = vpack.c.b16 %v1167, %v1166
    %v1197 = vpack.c.b16 %v1169, %v1168
    %v1198 = vpack.c.b16 %v1171, %v1170
    %v1199 = vpack.c.b16 %v1173, %v1172
    %v1200 = vpack.c.b16 %v1175, %v1174
    %v1201 = vpack.c.b16 %v1177, %v1176
    %v1202 = vpack.c.b16 %v1179, %v1178
    %v1203 = vpack.c.b16 %v1181, %v1180
    %v1204 = vpack.c.b16 %v1183, %v1182
    %v1205 = vpack.c.b16 %v1185, %v1184
    %v1206 = vpack.c.b16 %v1187, %v1186
    %v1207 = vpack.c.b16 %v1189, %v1188
    %v1208 = vpack.c.b16 %v1191, %v1190
    %v1209 = vpack.c.b16 %v1193, %v1192
    %1226 = vmatprep.subr.bf16.mxu0 0
    %1227 = vmatpush1.bf16.msra.mxu0 %v1201
    %1228 = vmatprep.subr.bf16.mxu0 0
    %1229 = vmatpush1.bf16.msra.mxu0 %v1200
    %1230 = vmatprep.subr.bf16.mxu0 0
    %1231 = vmatpush1.bf16.msra.mxu0 %v1199
    %1232 = vmatprep.subr.bf16.mxu0 0
    %1233 = vmatpush1.bf16.msra.mxu0 %v1198
    %1234 = vmatprep.subr.bf16.mxu0 0
    %1235 = vmatpush1.bf16.msra.mxu0 %v1197
    %1236 = vmatprep.subr.bf16.mxu0 0
    %1237 = vmatpush1.bf16.msra.mxu0 %v1196
    %1238 = vmatprep.subr.bf16.mxu0 0
    %1239 = vmatpush1.bf16.msra.mxu0 %v1195
    %1240 = vmatprep.subr.bf16.mxu0 0
    %1241 = vmatpush1.bf16.msra.mxu0 %v1194
    %1242 = vmatprep.subr.bf16.mxu0 0
    %1243 = vmatpush2.bf16.msra.mxu0 %v1209
    %1244 = vmatprep.subr.bf16.mxu0 0
    %1245 = vmatpush2.bf16.msra.mxu0 %v1208
    %1246 = vmatprep.subr.bf16.mxu0 0
    %1247 = vmatpush2.bf16.msra.mxu0 %v1207
    %1248 = vmatprep.subr.bf16.mxu0 0
    %1249 = vmatpush2.bf16.msra.mxu0 %v1206
    %1250 = vmatprep.subr.bf16.mxu0 0
    %1251 = vmatpush2.bf16.msra.mxu0 %v1205
    %1252 = vmatprep.subr.bf16.mxu0 0
    %1253 = vmatpush2.bf16.msra.mxu0 %v1204
    %1254 = vmatprep.subr.bf16.mxu0 0
    %1255 = vmatpush2.bf16.msra.mxu0 %v1203
    %1256 = vmatprep.subr.bf16.mxu0 0
    %1257 = vmatpush2.bf16.msra.mxu0 %v1202
    %1258 = vmatprep.mubr.bf16.mxu0 %v1097
    %1259 = vmatmul.mubr.bf16.gmra.mxu0 %v1096
    %v1260 = vpop.f32.mrf.mxu0
    %v1261 = vadd.f32 0.0, %v1260
    %v1262 = vpop.f32.mrf.mxu0
    %v1263 = vpop.f32.mrf.mxu0
    %v1264 = vadd.f32 0.0, %v1263
    %v1265 = vpop.f32.mrf.mxu0
    %1266 = vdwg.mxu0
    %v1267 = vadd.f32 %v862, %v1261
    %v1268 = vadd.f32 %v863, %v1264
    %v1269 = vld [vmem:[%s14] sm:$0x1]
    %v1271 = vlaneseq
    %v1272 = vshrl.u32 %v1271, 7
    %v1273 = vsub.s32 0, %v1272
    %v1274 = vrot.slane %v1269, %v1273
    %v1276 = vadd.f32 %v1267, %v1274
    %v1277 = vadd.f32 %v1268, %v1274
    %s1278 = scalar_lea.vmem %s3, 1
    %v1279 = vld [vmem:[%s1278] sm:$0x1]
    %s1280 = scalar_lea.vmem %s4, 1
    %v1281 = vld [vmem:[%s1280] sm:$0x1]
    %1282 = vadd.xlane.f32.xlu0 %v1276
    %v1283 = vpop.xlane.xlu0 %1282
    %1284 = vadd.xlane.f32.xlu0 %v1277
    %v1285 = vpop.xlane.xlu0 %1284
    %v1286 = vmul.f32 %v1283, %v174
    %v1287 = vmul.f32 %v1285, %v174
    %v1288 = vmul.f32 %v1276, %v1276
    %v1289 = vmul.f32 %v1277, %v1277
    %1290 = vadd.xlane.f32.xlu0 %v1288
    %v1291 = vpop.xlane.xlu0 %1290
    %1292 = vadd.xlane.f32.xlu0 %v1289
    %v1293 = vpop.xlane.xlu0 %1292
    %v1294 = vmul.f32 %v1291, %v174
    %v1295 = vmul.f32 %v1293, %v174
    %v1296 = vmul.f32 %v1286, %v1286
    %v1297 = vmul.f32 %v1287, %v1287
    %v1298 = vsub.f32 %v1294, %v1296
    %v1299 = vsub.f32 %v1295, %v1297
    %v1300 = vsub.f32 %v1276, %v1286
    %v1301 = vsub.f32 %v1277, %v1287
    %v1302 = vadd.f32 %v1298, 1e-05
    %v1303 = vadd.f32 %v1299, 1e-05
    %v1304 = vrsqrt.pop %v1302
    %v1305 = vrsqrt.pop %v1303
    %v1306 = vmul.f32 %v1300, %v1304
    %v1307 = vmul.f32 %v1301, %v1305
    %v1309 = vlaneseq
    %v1310 = vshrl.u32 %v1309, 7
    %v1311 = vsub.s32 0, %v1310
    %v1312 = vrot.slane %v1279, %v1311
    %v1314 = vmul.f32 %v1306, %v1312
    %v1315 = vmul.f32 %v1307, %v1312
    %v1317 = vlaneseq
    %v1318 = vshrl.u32 %v1317, 7
    %v1319 = vsub.s32 0, %v1318
    %v1320 = vrot.slane %v1281, %v1319
    %v1322 = vadd.f32 %v1314, %v1320
    %v1323 = vadd.f32 %v1315, %v1320
    %v1324 = vpack.c.bf16 %v1323, %v1322
    %s1325 = scalar_lea.vmem [#allocation7], 192
    %v1326 = vld [vmem:[%s1325] sm:$0xff]
    %v1327 = vld [vmem:[%s1325 + $0x8] sm:$0xf]
    %v1328 = vld [vmem:[%s1325 + $0xc] sm:$0xff]
    %v1329 = vld [vmem:[%s1325 + $0x14] sm:$0xf]
    %v1330 = vld [vmem:[%s1325 + $0x18] sm:$0xff]
    %v1331 = vld [vmem:[%s1325 + $0x20] sm:$0xf]
    %v1332 = vld [vmem:[%s1325 + $0x24] sm:$0xff]
    %v1333 = vld [vmem:[%s1325 + $0x2c] sm:$0xf]
    %v1334 = vld [vmem:[%s1325 + $0x30] sm:$0xff]
    %v1335 = vld [vmem:[%s1325 + $0x38] sm:$0xf]
    %v1336 = vld [vmem:[%s1325 + $0x3c] sm:$0xff]
    %v1337 = vld [vmem:[%s1325 + $0x44] sm:$0xf]
    %v1338 = vld [vmem:[%s1325 + $0x48] sm:$0xff]
    %v1339 = vld [vmem:[%s1325 + $0x50] sm:$0xf]
    %v1340 = vld [vmem:[%s1325 + $0x54] sm:$0xff]
    %v1341 = vld [vmem:[%s1325 + $0x5c] sm:$0xf]
    %v1342 = vld [vmem:[%s1325 + $0x60] sm:$0xff]
    %v1343 = vld [vmem:[%s1325 + $0x68] sm:$0xf]
    %v1344 = vld [vmem:[%s1325 + $0x6c] sm:$0xff]
    %v1345 = vld [vmem:[%s1325 + $0x74] sm:$0xf]
    %v1346 = vld [vmem:[%s1325 + $0x78] sm:$0xff]
    %v1347 = vld [vmem:[%s1325 + $0x80] sm:$0xf]
    %v1348 = vld [vmem:[%s1325 + $0x84] sm:$0xff]
    %v1349 = vld [vmem:[%s1325 + $0x8c] sm:$0xf]
    %v1350 = vld [vmem:[%s1325 + $0x90] sm:$0xff]
    %v1351 = vld [vmem:[%s1325 + $0x98] sm:$0xf]
    %v1352 = vld [vmem:[%s1325 + $0x9c] sm:$0xff]
    %v1353 = vld [vmem:[%s1325 + $0xa4] sm:$0xf]
    %v1354 = vld [vmem:[%s1325 + $0xa8] sm:$0xff]
    %v1355 = vld [vmem:[%s1325 + $0xb0] sm:$0xf]
    %v1356 = vld [vmem:[%s1325 + $0xb4] sm:$0xff]
    %v1357 = vld [vmem:[%s1325 + $0xbc] sm:$0xf]
    %s1358 = scalar_lea.vmem %s6, 3
    %v1359 = vld [vmem:[%s1358] sm:$0x7]
    %v1361 = vlaneseq
    %v1362 = vshrl.u32 %v1361, 7
    %v1363 = vsub.s32 0, %v1362
    %v1364 = vrot.slane %v1359, %v1363
    %v1365 = vlaneseq
    %v1366 = vshrl.u32 %v1365, 7
    %v1367 = vsub.s32 1, %v1366
    %v1368 = vrot.slane %v1359, %v1367
    %v1369 = vlaneseq
    %v1370 = vshrl.u32 %v1369, 7
    %v1371 = vsub.s32 2, %v1370
    %v1372 = vrot.slane %v1359, %v1371
    %v1408 = vunpack.c.l.b16 %v1326
    %v1409 = vunpack.c.h.b16 %v1326
    %v1410 = vunpack.c.l.b16 %v1327
    %v1411 = vunpack.c.l.b16 %v1328
    %v1412 = vunpack.c.h.b16 %v1328
    %v1413 = vunpack.c.l.b16 %v1329
    %v1414 = vunpack.c.l.b16 %v1330
    %v1415 = vunpack.c.h.b16 %v1330
    %v1416 = vunpack.c.l.b16 %v1331
    %v1417 = vunpack.c.l.b16 %v1332
    %v1418 = vunpack.c.h.b16 %v1332
    %v1419 = vunpack.c.l.b16 %v1333
    %v1420 = vunpack.c.l.b16 %v1334
    %v1421 = vunpack.c.h.b16 %v1334
    %v1422 = vunpack.c.l.b16 %v1335
    %v1423 = vunpack.c.l.b16 %v1336
    %v1424 = vunpack.c.h.b16 %v1336
    %v1425 = vunpack.c.l.b16 %v1337
    %v1426 = vunpack.c.l.b16 %v1338
    %v1427 = vunpack.c.h.b16 %v1338
    %v1428 = vunpack.c.l.b16 %v1339
    %v1429 = vunpack.c.l.b16 %v1340
    %v1430 = vunpack.c.h.b16 %v1340
    %v1431 = vunpack.c.l.b16 %v1341
    %v1432 = vunpack.c.l.b16 %v1342
    %v1433 = vunpack.c.h.b16 %v1342
    %v1434 = vunpack.c.l.b16 %v1343
    %v1435 = vunpack.c.l.b16 %v1344
    %v1436 = vunpack.c.h.b16 %v1344
    %v1437 = vunpack.c.l.b16 %v1345
    %v1438 = vunpack.c.l.b16 %v1346
    %v1439 = vunpack.c.h.b16 %v1346
    %v1440 = vunpack.c.l.b16 %v1347
    %v1441 = vunpack.c.l.b16 %v1348
    %v1442 = vunpack.c.h.b16 %v1348
    %v1443 = vunpack.c.l.b16 %v1349
    %v1444 = vunpack.c.l.b16 %v1350
    %v1445 = vunpack.c.h.b16 %v1350
    %v1446 = vunpack.c.l.b16 %v1351
    %v1447 = vunpack.c.l.b16 %v1352
    %v1448 = vunpack.c.h.b16 %v1352
    %v1449 = vunpack.c.l.b16 %v1353
    %v1450 = vunpack.c.l.b16 %v1354
    %v1451 = vunpack.c.h.b16 %v1354
    %v1452 = vunpack.c.l.b16 %v1355
    %v1453 = vunpack.c.l.b16 %v1356
    %v1454 = vunpack.c.h.b16 %v1356
    %v1455 = vunpack.c.l.b16 %v1357
    %v1456 = vpack.c.b16 %v1411, %v1408
    %v1457 = vpack.c.b16 %v1412, %v1409
    %v1458 = vpack.c.b16 %v1413, %v1410
    %v1459 = vpack.c.b16 %v1417, %v1414
    %v1460 = vpack.c.b16 %v1418, %v1415
    %v1461 = vpack.c.b16 %v1419, %v1416
    %v1462 = vpack.c.b16 %v1423, %v1420
    %v1463 = vpack.c.b16 %v1424, %v1421
    %v1464 = vpack.c.b16 %v1425, %v1422
    %v1465 = vpack.c.b16 %v1429, %v1426
    %v1466 = vpack.c.b16 %v1430, %v1427
    %v1467 = vpack.c.b16 %v1431, %v1428
    %v1468 = vpack.c.b16 %v1435, %v1432
    %v1469 = vpack.c.b16 %v1436, %v1433
    %v1470 = vpack.c.b16 %v1437, %v1434
    %v1471 = vpack.c.b16 %v1441, %v1438
    %v1472 = vpack.c.b16 %v1442, %v1439
    %v1473 = vpack.c.b16 %v1443, %v1440
    %v1474 = vpack.c.b16 %v1447, %v1444
    %v1475 = vpack.c.b16 %v1448, %v1445
    %v1476 = vpack.c.b16 %v1449, %v1446
    %v1477 = vpack.c.b16 %v1453, %v1450
    %v1478 = vpack.c.b16 %v1454, %v1451
    %v1479 = vpack.c.b16 %v1455, %v1452
    %1504 = vmatprep.subr.bf16.mxu0 %v1478
    %1505 = vmatpush1.bf16.msra.mxu0 %v1477
    %1506 = vmatprep.subr.bf16.mxu0 %v1475
    %1507 = vmatpush1.bf16.msra.mxu0 %v1474
    %1508 = vmatprep.subr.bf16.mxu0 %v1472
    %1509 = vmatpush1.bf16.msra.mxu0 %v1471
    %1510 = vmatprep.subr.bf16.mxu0 %v1469
    %1511 = vmatpush1.bf16.msra.mxu0 %v1468
    %1512 = vmatprep.subr.bf16.mxu0 %v1466
    %1513 = vmatpush1.bf16.msra.mxu0 %v1465
    %1514 = vmatprep.subr.bf16.mxu0 %v1463
    %1515 = vmatpush1.bf16.msra.mxu0 %v1462
    %1516 = vmatprep.subr.bf16.mxu0 %v1460
    %1517 = vmatpush1.bf16.msra.mxu0 %v1459
    %1518 = vmatprep.subr.bf16.mxu0 %v1457
    %1519 = vmatpush1.bf16.msra.mxu0 %v1456
    %1520 = vmatprep.subr.bf16.mxu0 0
    %1521 = vmatpush2.bf16.msra.mxu0 0
    %1522 = vmatprep.subr.bf16.mxu0 0
    %1523 = vmatpush2.bf16.msra.mxu0 0
    %1524 = vmatprep.subr.bf16.mxu0 0
    %1525 = vmatpush2.bf16.msra.mxu0 0
    %1526 = vmatprep.subr.bf16.mxu0 0
    %1527 = vmatpush2.bf16.msra.mxu0 0
    %1528 = vmatprep.subr.bf16.mxu0 0
    %1529 = vmatpush2.bf16.msra.mxu0 0
    %1530 = vmatprep.subr.bf16.mxu0 0
    %1531 = vmatpush2.bf16.msra.mxu0 0
    %1532 = vmatprep.subr.bf16.mxu0 0
    %1533 = vmatpush2.bf16.msra.mxu0 0
    %1534 = vmatprep.subr.bf16.mxu0 0
    %1535 = vmatpush2.bf16.msra.mxu0 0
    %1536 = vmatprep.mubr.bf16.mxu0 0
    %1537 = vmatmul.mubr.bf16.gmra.mxu0 %v1324
    %v1538 = vpop.f32.mrf.mxu0
    %v1539 = vadd.f32 %v1364, %v1538
    %v1540 = vpop.f32.mrf.mxu0
    %v1541 = vadd.f32 %v1368, %v1540
    %v1542 = vpop.f32.mrf.mxu0
    %v1543 = vadd.f32 %v1364, %v1542
    %v1544 = vpop.f32.mrf.mxu0
    %v1545 = vadd.f32 %v1368, %v1544
    %1546 = vdwg.mxu0
    %1547 = vmatprep.subr.bf16.mxu0 0
    %1548 = vmatpush1.bf16.msra.mxu0 %v1479
    %1549 = vmatprep.subr.bf16.mxu0 0
    %1550 = vmatpush1.bf16.msra.mxu0 %v1476
    %1551 = vmatprep.subr.bf16.mxu0 0
    %1552 = vmatpush1.bf16.msra.mxu0 %v1473
    %1553 = vmatprep.subr.bf16.mxu0 0
    %1554 = vmatpush1.bf16.msra.mxu0 %v1470
    %1555 = vmatprep.subr.bf16.mxu0 0
    %1556 = vmatpush1.bf16.msra.mxu0 %v1467
    %1557 = vmatprep.subr.bf16.mxu0 0
    %1558 = vmatpush1.bf16.msra.mxu0 %v1464
    %1559 = vmatprep.subr.bf16.mxu0 0
    %1560 = vmatpush1.bf16.msra.mxu0 %v1461
    %1561 = vmatprep.subr.bf16.mxu0 0
    %1562 = vmatpush1.bf16.msra.mxu0 %v1458
    %1563 = vmatprep.subr.bf16.mxu0 0
    %1564 = vmatpush2.bf16.msra.mxu0 0
    %1565 = vmatprep.subr.bf16.mxu0 0
    %1566 = vmatpush2.bf16.msra.mxu0 0
    %1567 = vmatprep.subr.bf16.mxu0 0
    %1568 = vmatpush2.bf16.msra.mxu0 0
    %1569 = vmatprep.subr.bf16.mxu0 0
    %1570 = vmatpush2.bf16.msra.mxu0 0
    %1571 = vmatprep.subr.bf16.mxu0 0
    %1572 = vmatpush2.bf16.msra.mxu0 0
    %1573 = vmatprep.subr.bf16.mxu0 0
    %1574 = vmatpush2.bf16.msra.mxu0 0
    %1575 = vmatprep.subr.bf16.mxu0 0
    %1576 = vmatpush2.bf16.msra.mxu0 0
    %1577 = vmatprep.subr.bf16.mxu0 0
    %1578 = vmatpush2.bf16.msra.mxu0 0
    %1579 = vmatprep.mubr.bf16.mxu0 0
    %1580 = vmatmul.mubr.bf16.gmra.mxu0 %v1324
    %v1581 = vpop.f32.mrf.mxu0
    %v1582 = vadd.f32 %v1372, %v1581
    %v1583 = vpop.f32.mrf.mxu0
    %v1584 = vpop.f32.mrf.mxu0
    %v1585 = vadd.f32 %v1372, %v1584
    %v1586 = vpop.f32.mrf.mxu0
    %1587 = vdwg.mxu0
    %v1588 = vpack.c.bf16 %v1543, %v1539
    %v1589 = vpack.c.bf16 %v1545, %v1541
    %v1590 = vpack.c.bf16 %v1585, %v1582
    %v1591 = vmul.bf16 %v1588, %v156
    %v1592 = vmul.bf16 %v1588, %v157
    %v1593 = vmul.bf16 %v1588, %v158
    %v1594 = vmul.bf16 %v1588, %v159
    %1595 = vmatprep.subr.bf16.mxu0 0
    %1596 = vmatpush1.bf16.xpose.msra.mxu0 0
    %1597 = vmatprep.subr.bf16.mxu0 0
    %1598 = vmatpush1.bf16.xpose.msra.mxu0 0
    %1599 = vmatprep.subr.bf16.mxu0 0
    %1600 = vmatpush1.bf16.xpose.msra.mxu0 0
    %1601 = vmatprep.subr.bf16.mxu0 0
    %1602 = vmatpush1.bf16.xpose.msra.mxu0 0
    %1603 = vmatprep.subr.bf16.mxu0 0
    %1604 = vmatpush1.bf16.xpose.msra.mxu0 0
    %1605 = vmatprep.subr.bf16.mxu0 0
    %1606 = vmatpush1.bf16.xpose.msra.mxu0 0
    %1607 = vmatprep.subr.bf16.mxu0 0
    %1608 = vmatpush1.bf16.xpose.msra.mxu0 0
    %1609 = vmatprep.subr.bf16.mxu0 0
    %1610 = vmatpush1.bf16.xpose.msra.mxu0 %v1589
    %1611 = vmatprep.subr.bf16.mxu0 0
    %1612 = vmatpush2.bf16.xpose.msra.mxu0 0
    %1613 = vmatprep.subr.bf16.mxu0 0
    %1614 = vmatpush2.bf16.xpose.msra.mxu0 0
    %1615 = vmatprep.subr.bf16.mxu0 0
    %1616 = vmatpush2.bf16.xpose.msra.mxu0 0
    %1617 = vmatprep.subr.bf16.mxu0 0
    %1618 = vmatpush2.bf16.xpose.msra.mxu0 0
    %1619 = vmatprep.subr.bf16.mxu0 0
    %1620 = vmatpush2.bf16.xpose.msra.mxu0 0
    %1621 = vmatprep.subr.bf16.mxu0 0
    %1622 = vmatpush2.bf16.xpose.msra.mxu0 0
    %1623 = vmatprep.subr.bf16.mxu0 0
    %1624 = vmatpush2.bf16.xpose.msra.mxu0 0
    %1625 = vmatprep.subr.bf16.mxu0 0
    %1626 = vmatpush2.bf16.xpose.msra.mxu0 0
    %1627 = vmatprep.mubr.bf16.mxu0 0
    %1628 = vmatmul.mubr.bf16.gmra.mxu0 %v1591
    %v1629 = vpop.f32.mrf.mxu0
    %v1630 = vadd.f32 0.0, %v1629
    %v1631 = vpop.f32.mrf.mxu0
    %v1632 = vpop.f32.mrf.mxu0
    %v1633 = vadd.f32 0.0, %v1632
    %v1634 = vpop.f32.mrf.mxu0
    %1635 = vmatprep.mubr.bf16.mxu0 0
    %1636 = vmatmul.mubr.bf16.gmra.mxu0 %v1592
    %v1637 = vpop.f32.mrf.mxu0
    %v1638 = vadd.f32 0.0, %v1637
    %v1639 = vpop.f32.mrf.mxu0
    %v1640 = vpop.f32.mrf.mxu0
    %v1641 = vadd.f32 0.0, %v1640
    %v1642 = vpop.f32.mrf.mxu0
    %1643 = vmatprep.mubr.bf16.mxu0 0
    %1644 = vmatmul.mubr.bf16.gmra.mxu0 %v1593
    %v1645 = vpop.f32.mrf.mxu0
    %v1646 = vadd.f32 0.0, %v1645
    %v1647 = vpop.f32.mrf.mxu0
    %v1648 = vpop.f32.mrf.mxu0
    %v1649 = vadd.f32 0.0, %v1648
    %v1650 = vpop.f32.mrf.mxu0
    %1651 = vmatprep.mubr.bf16.mxu0 0
    %1652 = vmatmul.mubr.bf16.gmra.mxu0 %v1594
    %v1653 = vpop.f32.mrf.mxu0
    %v1654 = vadd.f32 0.0, %v1653
    %v1655 = vpop.f32.mrf.mxu0
    %v1656 = vpop.f32.mrf.mxu0
    %v1657 = vadd.f32 0.0, %v1656
    %v1658 = vpop.f32.mrf.mxu0
    %1659 = vdwg.mxu0
    %v1660 = vmul.f32 %v1630, 0.17677669
    %v1661 = vmul.f32 %v1633, 0.17677669
    %v1662 = vmul.f32 %v1638, 0.17677669
    %v1663 = vmul.f32 %v1641, 0.17677669
    %v1664 = vmul.f32 %v1646, 0.17677669
    %v1665 = vmul.f32 %v1649, 0.17677669
    %v1666 = vmul.f32 %v1654, 0.17677669
    %v1667 = vmul.f32 %v1657, 0.17677669
    %v1668 = vadd.f32 %v1660, %v160
    %v1669 = vadd.f32 %v1661, %v161
    %v1670 = vadd.f32 %v1662, %v162
    %v1671 = vadd.f32 %v1663, %v163
    %v1672 = vadd.f32 %v1664, %v164
    %v1673 = vadd.f32 %v1665, %v165
    %v1674 = vadd.f32 %v1666, %v166
    %v1675 = vadd.f32 %v1667, %v167
    %v1676 = vsel %vm563, %v1668, -inf
    %1677 = vmax.xlane.f32.xlu0 %v1676
    %v1678 = vpop.xlane.xlu0 %1677
    %v1679 = vsel %vm563, %v1669, -inf
    %1680 = vmax.xlane.f32.xlu0 %v1679
    %v1681 = vpop.xlane.xlu0 %1680
    %v1682 = vsel %vm563, %v1670, -inf
    %1683 = vmax.xlane.f32.xlu0 %v1682
    %v1684 = vpop.xlane.xlu0 %1683
    %v1685 = vsel %vm563, %v1671, -inf
    %1686 = vmax.xlane.f32.xlu0 %v1685
    %v1687 = vpop.xlane.xlu0 %1686
    %v1688 = vsel %vm563, %v1672, -inf
    %1689 = vmax.xlane.f32.xlu0 %v1688
    %v1690 = vpop.xlane.xlu0 %1689
    %v1691 = vsel %vm563, %v1673, -inf
    %1692 = vmax.xlane.f32.xlu0 %v1691
    %v1693 = vpop.xlane.xlu0 %1692
    %v1694 = vsel %vm563, %v1674, -inf
    %1695 = vmax.xlane.f32.xlu0 %v1694
    %v1696 = vpop.xlane.xlu0 %1695
    %v1697 = vsel %vm563, %v1675, -inf
    %1698 = vmax.xlane.f32.xlu0 %v1697
    %v1699 = vpop.xlane.xlu0 %1698
    %v1700 = vsub.f32 %v1668, %v1678
    %v1701 = vsub.f32 %v1669, %v1681
    %v1702 = vsub.f32 %v1670, %v1684
    %v1703 = vsub.f32 %v1671, %v1687
    %v1704 = vsub.f32 %v1672, %v1690
    %v1705 = vsub.f32 %v1673, %v1693
    %v1706 = vsub.f32 %v1674, %v1696
    %v1707 = vsub.f32 %v1675, %v1699
    %v1708 = vmul.f32 %v1700, 1.442695
    %v1709 = vpow.pop %v1708
    %v1710 = vmul.f32 %v1701, 1.442695
    %v1711 = vpow.pop %v1710
    %v1712 = vmul.f32 %v1702, 1.442695
    %v1713 = vpow.pop %v1712
    %v1714 = vmul.f32 %v1703, 1.442695
    %v1715 = vpow.pop %v1714
    %v1716 = vmul.f32 %v1704, 1.442695
    %v1717 = vpow.pop %v1716
    %v1718 = vmul.f32 %v1705, 1.442695
    %v1719 = vpow.pop %v1718
    %v1720 = vmul.f32 %v1706, 1.442695
    %v1721 = vpow.pop %v1720
    %v1722 = vmul.f32 %v1707, 1.442695
    %v1723 = vpow.pop %v1722
    %v1724 = vsel %vm563, %v1709, 0.0
    %1725 = vadd.xlane.f32.xlu0 %v1724
    %v1726 = vpop.xlane.xlu0 %1725
    %v1727 = vsel %vm563, %v1711, 0.0
    %1728 = vadd.xlane.f32.xlu0 %v1727
    %v1729 = vpop.xlane.xlu0 %1728
    %v1730 = vsel %vm563, %v1713, 0.0
    %1731 = vadd.xlane.f32.xlu0 %v1730
    %v1732 = vpop.xlane.xlu0 %1731
    %v1733 = vsel %vm563, %v1715, 0.0
    %1734 = vadd.xlane.f32.xlu0 %v1733
    %v1735 = vpop.xlane.xlu0 %1734
    %v1736 = vsel %vm563, %v1717, 0.0
    %1737 = vadd.xlane.f32.xlu0 %v1736
    %v1738 = vpop.xlane.xlu0 %1737
    %v1739 = vsel %vm563, %v1719, 0.0
    %1740 = vadd.xlane.f32.xlu0 %v1739
    %v1741 = vpop.xlane.xlu0 %1740
    %v1742 = vsel %vm563, %v1721, 0.0
    %1743 = vadd.xlane.f32.xlu0 %v1742
    %v1744 = vpop.xlane.xlu0 %1743
    %v1745 = vsel %vm563, %v1723, 0.0
    %1746 = vadd.xlane.f32.xlu0 %v1745
    %v1747 = vpop.xlane.xlu0 %1746
    %v1748 = vrcp.pop %v1726
    %v1749 = vrcp.pop %v1729
    %v1750 = vrcp.pop %v1732
    %v1751 = vrcp.pop %v1735
    %v1752 = vrcp.pop %v1738
    %v1753 = vrcp.pop %v1741
    %v1754 = vrcp.pop %v1744
    %v1755 = vrcp.pop %v1747
    %v1756 = vmul.f32 %v1709, %v1748
    %v1757 = vmul.f32 %v1711, %v1749
    %v1758 = vmul.f32 %v1713, %v1750
    %v1759 = vmul.f32 %v1715, %v1751
    %v1760 = vmul.f32 %v1717, %v1752
    %v1761 = vmul.f32 %v1719, %v1753
    %v1762 = vmul.f32 %v1721, %v1754
    %v1763 = vmul.f32 %v1723, %v1755
    %v1764 = vpack.c.bf16 %v1757, %v1756
    %v1765 = vpack.c.bf16 %v1759, %v1758
    %v1766 = vpack.c.bf16 %v1761, %v1760
    %v1767 = vpack.c.bf16 %v1763, %v1762
    %v1769 = vsel %vm563, %v1764, 0
    %v1772 = vsel %vm563, %v1765, 0
    %v1775 = vsel %vm563, %v1766, 0
    %v1778 = vsel %vm563, %v1767, 0
    %1780 = vmatprep.subr.bf16.mxu0 0
    %1781 = vmatpush1.bf16.msra.mxu0 0
    %1782 = vmatprep.subr.bf16.mxu0 0
    %1783 = vmatpush1.bf16.msra.mxu0 0
    %1784 = vmatprep.subr.bf16.mxu0 0
    %1785 = vmatpush1.bf16.msra.mxu0 0
    %1786 = vmatprep.subr.bf16.mxu0 0
    %1787 = vmatpush1.bf16.msra.mxu0 0
    %1788 = vmatprep.subr.bf16.mxu0 0
    %1789 = vmatpush1.bf16.msra.mxu0 0
    %1790 = vmatprep.subr.bf16.mxu0 0
    %1791 = vmatpush1.bf16.msra.mxu0 0
    %1792 = vmatprep.subr.bf16.mxu0 0
    %1793 = vmatpush1.bf16.msra.mxu0 0
    %1794 = vmatprep.subr.bf16.mxu0 0
    %1795 = vmatpush1.bf16.msra.mxu0 %v1590
    %1796 = vmatprep.subr.bf16.mxu0 0
    %1797 = vmatpush2.bf16.msra.mxu0 0
    %1798 = vmatprep.subr.bf16.mxu0 0
    %1799 = vmatpush2.bf16.msra.mxu0 0
    %1800 = vmatprep.subr.bf16.mxu0 0
    %1801 = vmatpush2.bf16.msra.mxu0 0
    %1802 = vmatprep.subr.bf16.mxu0 0
    %1803 = vmatpush2.bf16.msra.mxu0 0
    %1804 = vmatprep.subr.bf16.mxu0 0
    %1805 = vmatpush2.bf16.msra.mxu0 0
    %1806 = vmatprep.subr.bf16.mxu0 0
    %1807 = vmatpush2.bf16.msra.mxu0 0
    %1808 = vmatprep.subr.bf16.mxu0 0
    %1809 = vmatpush2.bf16.msra.mxu0 0
    %1810 = vmatprep.subr.bf16.mxu0 0
    %1811 = vmatpush2.bf16.msra.mxu0 0
    %1812 = vmatprep.mubr.bf16.mxu0 0
    %1813 = vmatmul.mubr.bf16.gmra.mxu0 %v1769
    %v1814 = vpop.f32.mrf.mxu0
    %v1815 = vadd.f32 0.0, %v1814
    %v1816 = vpop.f32.mrf.mxu0
    %v1817 = vpop.f32.mrf.mxu0
    %v1818 = vadd.f32 0.0, %v1817
    %v1819 = vpop.f32.mrf.mxu0
    %1820 = vmatprep.mubr.bf16.mxu0 0
    %1821 = vmatmul.mubr.bf16.gmra.mxu0 %v1772
    %v1822 = vpop.f32.mrf.mxu0
    %v1823 = vadd.f32 0.0, %v1822
    %v1824 = vpop.f32.mrf.mxu0
    %v1825 = vpop.f32.mrf.mxu0
    %v1826 = vadd.f32 0.0, %v1825
    %v1827 = vpop.f32.mrf.mxu0
    %1828 = vmatprep.mubr.bf16.mxu0 0
    %1829 = vmatmul.mubr.bf16.gmra.mxu0 %v1775
    %v1830 = vpop.f32.mrf.mxu0
    %v1831 = vadd.f32 0.0, %v1830
    %v1832 = vpop.f32.mrf.mxu0
    %v1833 = vpop.f32.mrf.mxu0
    %v1834 = vadd.f32 0.0, %v1833
    %v1835 = vpop.f32.mrf.mxu0
    %1836 = vmatprep.mubr.bf16.mxu0 0
    %1837 = vmatmul.mubr.bf16.gmra.mxu0 %v1778
    %v1838 = vpop.f32.mrf.mxu0
    %v1839 = vadd.f32 0.0, %v1838
    %v1840 = vpop.f32.mrf.mxu0
    %v1841 = vpop.f32.mrf.mxu0
    %v1842 = vadd.f32 0.0, %v1841
    %v1843 = vpop.f32.mrf.mxu0
    %1844 = vdwg.mxu0
    %v1845 = vmul.f32 %v1815, %v148
    %v1846 = vmul.f32 %v1818, %v149
    %v1847 = vmul.f32 %v1823, %v150
    %v1848 = vmul.f32 %v1826, %v151
    %v1849 = vadd.f32 %v1845, %v1847
    %v1850 = vadd.f32 %v1846, %v1848
    %v1851 = vmul.f32 %v1831, %v152
    %v1852 = vmul.f32 %v1834, %v153
    %v1853 = vadd.f32 %v1849, %v1851
    %v1854 = vadd.f32 %v1850, %v1852
    %v1855 = vmul.f32 %v1839, %v154
    %v1856 = vmul.f32 %v1842, %v155
    %v1857 = vadd.f32 %v1853, %v1855
    %v1858 = vadd.f32 %v1854, %v1856
    %v1859 = vpack.c.bf16 %v1858, %v1857
    %s1860 = scalar_lea.vmem [#allocation8], 64
    %v1861 = vld [vmem:[%s1860] sm:$0xf]
    %v1862 = vld [vmem:[%s1860 + $0x4] sm:$0xf]
    %v1863 = vld [vmem:[%s1860 + $0x8] sm:$0xf]
    %v1864 = vld [vmem:[%s1860 + $0xc] sm:$0xf]
    %v1865 = vld [vmem:[%s1860 + $0x10] sm:$0xf]
    %v1866 = vld [vmem:[%s1860 + $0x14] sm:$0xf]
    %v1867 = vld [vmem:[%s1860 + $0x18] sm:$0xf]
    %v1868 = vld [vmem:[%s1860 + $0x1c] sm:$0xf]
    %v1869 = vld [vmem:[%s1860 + $0x20] sm:$0xf]
    %v1870 = vld [vmem:[%s1860 + $0x24] sm:$0xf]
    %v1871 = vld [vmem:[%s1860 + $0x28] sm:$0xf]
    %v1872 = vld [vmem:[%s1860 + $0x2c] sm:$0xf]
    %v1873 = vld [vmem:[%s1860 + $0x30] sm:$0xf]
    %v1874 = vld [vmem:[%s1860 + $0x34] sm:$0xf]
    %v1875 = vld [vmem:[%s1860 + $0x38] sm:$0xf]
    %v1876 = vld [vmem:[%s1860 + $0x3c] sm:$0xf]
    %v1893 = vunpack.c.l.b16 %v1861
    %v1894 = vunpack.c.l.b16 %v1862
    %v1895 = vunpack.c.l.b16 %v1863
    %v1896 = vunpack.c.l.b16 %v1864
    %v1897 = vunpack.c.l.b16 %v1865
    %v1898 = vunpack.c.l.b16 %v1866
    %v1899 = vunpack.c.l.b16 %v1867
    %v1900 = vunpack.c.l.b16 %v1868
    %v1901 = vunpack.c.l.b16 %v1869
    %v1902 = vunpack.c.l.b16 %v1870
    %v1903 = vunpack.c.l.b16 %v1871
    %v1904 = vunpack.c.l.b16 %v1872
    %v1905 = vunpack.c.l.b16 %v1873
    %v1906 = vunpack.c.l.b16 %v1874
    %v1907 = vunpack.c.l.b16 %v1875
    %v1908 = vunpack.c.l.b16 %v1876
    %v1909 = vpack.c.b16 %v1894, %v1893
    %v1910 = vpack.c.b16 %v1896, %v1895
    %v1911 = vpack.c.b16 %v1898, %v1897
    %v1912 = vpack.c.b16 %v1900, %v1899
    %v1913 = vpack.c.b16 %v1902, %v1901
    %v1914 = vpack.c.b16 %v1904, %v1903
    %v1915 = vpack.c.b16 %v1906, %v1905
    %v1916 = vpack.c.b16 %v1908, %v1907
    %1925 = vmatprep.subr.bf16.mxu0 0
    %1926 = vmatpush1.bf16.msra.mxu0 %v1916
    %1927 = vmatprep.subr.bf16.mxu0 0
    %1928 = vmatpush1.bf16.msra.mxu0 %v1915
    %1929 = vmatprep.subr.bf16.mxu0 0
    %1930 = vmatpush1.bf16.msra.mxu0 %v1914
    %1931 = vmatprep.subr.bf16.mxu0 0
    %1932 = vmatpush1.bf16.msra.mxu0 %v1913
    %1933 = vmatprep.subr.bf16.mxu0 0
    %1934 = vmatpush1.bf16.msra.mxu0 %v1912
    %1935 = vmatprep.subr.bf16.mxu0 0
    %1936 = vmatpush1.bf16.msra.mxu0 %v1911
    %1937 = vmatprep.subr.bf16.mxu0 0
    %1938 = vmatpush1.bf16.msra.mxu0 %v1910
    %1939 = vmatprep.subr.bf16.mxu0 0
    %1940 = vmatpush1.bf16.msra.mxu0 %v1909
    %1941 = vmatprep.subr.bf16.mxu0 0
    %1942 = vmatpush2.bf16.msra.mxu0 0
    %1943 = vmatprep.subr.bf16.mxu0 0
    %1944 = vmatpush2.bf16.msra.mxu0 0
    %1945 = vmatprep.subr.bf16.mxu0 0
    %1946 = vmatpush2.bf16.msra.mxu0 0
    %1947 = vmatprep.subr.bf16.mxu0 0
    %1948 = vmatpush2.bf16.msra.mxu0 0
    %1949 = vmatprep.subr.bf16.mxu0 0
    %1950 = vmatpush2.bf16.msra.mxu0 0
    %1951 = vmatprep.subr.bf16.mxu0 0
    %1952 = vmatpush2.bf16.msra.mxu0 0
    %1953 = vmatprep.subr.bf16.mxu0 0
    %1954 = vmatpush2.bf16.msra.mxu0 0
    %1955 = vmatprep.subr.bf16.mxu0 0
    %1956 = vmatpush2.bf16.msra.mxu0 0
    %1957 = vmatprep.mubr.bf16.mxu0 0
    %1958 = vmatmul.mubr.bf16.gmra.mxu0 %v1859
    %v1959 = vpop.f32.mrf.mxu0
    %v1960 = vadd.f32 0.0, %v1959
    %v1961 = vpop.f32.mrf.mxu0
    %v1962 = vpop.f32.mrf.mxu0
    %v1963 = vadd.f32 0.0, %v1962
    %v1964 = vpop.f32.mrf.mxu0
    %1965 = vdwg.mxu0
    %v1966 = vadd.f32 %v1276, %v1960
    %v1967 = vadd.f32 %v1277, %v1963
    %s1968 = scalar_lea.vmem %s8, 1
    %v1969 = vld [vmem:[%s1968] sm:$0x1]
    %v1971 = vlaneseq
    %v1972 = vshrl.u32 %v1971, 7
    %v1973 = vsub.s32 0, %v1972
    %v1974 = vrot.slane %v1969, %v1973
    %v1976 = vadd.f32 %v1966, %v1974
    %v1977 = vadd.f32 %v1967, %v1974
    %s1978 = scalar_lea.vmem %s9, 1
    %v1979 = vld [vmem:[%s1978] sm:$0x1]
    %s1980 = scalar_lea.vmem %s10, 1
    %v1981 = vld [vmem:[%s1980] sm:$0x1]
    %1982 = vadd.xlane.f32.xlu0 %v1976
    %v1983 = vpop.xlane.xlu0 %1982
    %1984 = vadd.xlane.f32.xlu0 %v1977
    %v1985 = vpop.xlane.xlu0 %1984
    %v1986 = vmul.f32 %v1983, %v174
    %v1987 = vmul.f32 %v1985, %v174
    %v1988 = vmul.f32 %v1976, %v1976
    %v1989 = vmul.f32 %v1977, %v1977
    %1990 = vadd.xlane.f32.xlu0 %v1988
    %v1991 = vpop.xlane.xlu0 %1990
    %1992 = vadd.xlane.f32.xlu0 %v1989
    %v1993 = vpop.xlane.xlu0 %1992
    %v1994 = vmul.f32 %v1991, %v174
    %v1995 = vmul.f32 %v1993, %v174
    %v1996 = vmul.f32 %v1986, %v1986
    %v1997 = vmul.f32 %v1987, %v1987
    %v1998 = vsub.f32 %v1994, %v1996
    %v1999 = vsub.f32 %v1995, %v1997
    %v2000 = vsub.f32 %v1976, %v1986
    %v2001 = vsub.f32 %v1977, %v1987
    %v2002 = vadd.f32 %v1998, 1e-05
    %v2003 = vadd.f32 %v1999, 1e-05
    %v2004 = vrsqrt.pop %v2002
    %v2005 = vrsqrt.pop %v2003
    %v2006 = vmul.f32 %v2000, %v2004
    %v2007 = vmul.f32 %v2001, %v2005
    %v2009 = vlaneseq
    %v2010 = vshrl.u32 %v2009, 7
    %v2011 = vsub.s32 0, %v2010
    %v2012 = vrot.slane %v1979, %v2011
    %v2014 = vmul.f32 %v2006, %v2012
    %v2015 = vmul.f32 %v2007, %v2012
    %v2017 = vlaneseq
    %v2018 = vshrl.u32 %v2017, 7
    %v2019 = vsub.s32 0, %v2018
    %v2020 = vrot.slane %v1981, %v2019
    %v2022 = vadd.f32 %v2014, %v2020
    %v2023 = vadd.f32 %v2015, %v2020
    %v2024 = vpack.c.bf16 %v2023, %v2022
    %s2025 = scalar_lea.vmem %s11, 128
    %v2026 = vld [vmem:[%s2025] sm:$0xff]
    %v2027 = vld [vmem:[%s2025 + $0x8] sm:$0xff]
    %v2028 = vld [vmem:[%s2025 + $0x10] sm:$0xff]
    %v2029 = vld [vmem:[%s2025 + $0x18] sm:$0xff]
    %v2030 = vld [vmem:[%s2025 + $0x20] sm:$0xff]
    %v2031 = vld [vmem:[%s2025 + $0x28] sm:$0xff]
    %v2032 = vld [vmem:[%s2025 + $0x30] sm:$0xff]
    %v2033 = vld [vmem:[%s2025 + $0x38] sm:$0xff]
    %v2034 = vld [vmem:[%s2025 + $0x40] sm:$0xff]
    %v2035 = vld [vmem:[%s2025 + $0x48] sm:$0xff]
    %v2036 = vld [vmem:[%s2025 + $0x50] sm:$0xff]
    %v2037 = vld [vmem:[%s2025 + $0x58] sm:$0xff]
    %v2038 = vld [vmem:[%s2025 + $0x60] sm:$0xff]
    %v2039 = vld [vmem:[%s2025 + $0x68] sm:$0xff]
    %v2040 = vld [vmem:[%s2025 + $0x70] sm:$0xff]
    %v2041 = vld [vmem:[%s2025 + $0x78] sm:$0xff]
    %s2042 = scalar_lea.vmem %s12, 2
    %v2043 = vld [vmem:[%s2042] sm:$0x3]
    %v2045 = vlaneseq
    %v2046 = vshrl.u32 %v2045, 7
    %v2047 = vsub.s32 0, %v2046
    %v2048 = vrot.slane %v2043, %v2047
    %v2049 = vlaneseq
    %v2050 = vshrl.u32 %v2049, 7
    %v2051 = vsub.s32 1, %v2050
    %v2052 = vrot.slane %v2043, %v2051
    %v2071 = vunpack.c.l.b16 %v2026
    %v2072 = vunpack.c.h.b16 %v2026
    %v2073 = vunpack.c.l.b16 %v2027
    %v2074 = vunpack.c.h.b16 %v2027
    %v2075 = vunpack.c.l.b16 %v2028
    %v2076 = vunpack.c.h.b16 %v2028
    %v2077 = vunpack.c.l.b16 %v2029
    %v2078 = vunpack.c.h.b16 %v2029
    %v2079 = vunpack.c.l.b16 %v2030
    %v2080 = vunpack.c.h.b16 %v2030
    %v2081 = vunpack.c.l.b16 %v2031
    %v2082 = vunpack.c.h.b16 %v2031
    %v2083 = vunpack.c.l.b16 %v2032
    %v2084 = vunpack.c.h.b16 %v2032
    %v2085 = vunpack.c.l.b16 %v2033
    %v2086 = vunpack.c.h.b16 %v2033
    %v2087 = vunpack.c.l.b16 %v2034
    %v2088 = vunpack.c.h.b16 %v2034
    %v2089 = vunpack.c.l.b16 %v2035
    %v2090 = vunpack.c.h.b16 %v2035
    %v2091 = vunpack.c.l.b16 %v2036
    %v2092 = vunpack.c.h.b16 %v2036
    %v2093 = vunpack.c.l.b16 %v2037
    %v2094 = vunpack.c.h.b16 %v2037
    %v2095 = vunpack.c.l.b16 %v2038
    %v2096 = vunpack.c.h.b16 %v2038
    %v2097 = vunpack.c.l.b16 %v2039
    %v2098 = vunpack.c.h.b16 %v2039
    %v2099 = vunpack.c.l.b16 %v2040
    %v2100 = vunpack.c.h.b16 %v2040
    %v2101 = vunpack.c.l.b16 %v2041
    %v2102 = vunpack.c.h.b16 %v2041
    %v2103 = vpack.c.b16 %v2073, %v2071
    %v2104 = vpack.c.b16 %v2074, %v2072
    %v2105 = vpack.c.b16 %v2077, %v2075
    %v2106 = vpack.c.b16 %v2078, %v2076
    %v2107 = vpack.c.b16 %v2081, %v2079
    %v2108 = vpack.c.b16 %v2082, %v2080
    %v2109 = vpack.c.b16 %v2085, %v2083
    %v2110 = vpack.c.b16 %v2086, %v2084
    %v2111 = vpack.c.b16 %v2089, %v2087
    %v2112 = vpack.c.b16 %v2090, %v2088
    %v2113 = vpack.c.b16 %v2093, %v2091
    %v2114 = vpack.c.b16 %v2094, %v2092
    %v2115 = vpack.c.b16 %v2097, %v2095
    %v2116 = vpack.c.b16 %v2098, %v2096
    %v2117 = vpack.c.b16 %v2101, %v2099
    %v2118 = vpack.c.b16 %v2102, %v2100
    %2135 = vmatprep.subr.bf16.mxu0 %v2118
    %2136 = vmatpush1.bf16.msra.mxu0 %v2117
    %2137 = vmatprep.subr.bf16.mxu0 %v2116
    %2138 = vmatpush1.bf16.msra.mxu0 %v2115
    %2139 = vmatprep.subr.bf16.mxu0 %v2114
    %2140 = vmatpush1.bf16.msra.mxu0 %v2113
    %2141 = vmatprep.subr.bf16.mxu0 %v2112
    %2142 = vmatpush1.bf16.msra.mxu0 %v2111
    %2143 = vmatprep.subr.bf16.mxu0 %v2110
    %2144 = vmatpush1.bf16.msra.mxu0 %v2109
    %2145 = vmatprep.subr.bf16.mxu0 %v2108
    %2146 = vmatpush1.bf16.msra.mxu0 %v2107
    %2147 = vmatprep.subr.bf16.mxu0 %v2106
    %2148 = vmatpush1.bf16.msra.mxu0 %v2105
    %2149 = vmatprep.subr.bf16.mxu0 %v2104
    %2150 = vmatpush1.bf16.msra.mxu0 %v2103
    %2151 = vmatprep.subr.bf16.mxu0 0
    %2152 = vmatpush2.bf16.msra.mxu0 0
    %2153 = vmatprep.subr.bf16.mxu0 0
    %2154 = vmatpush2.bf16.msra.mxu0 0
    %2155 = vmatprep.subr.bf16.mxu0 0
    %2156 = vmatpush2.bf16.msra.mxu0 0
    %2157 = vmatprep.subr.bf16.mxu0 0
    %2158 = vmatpush2.bf16.msra.mxu0 0
    %2159 = vmatprep.subr.bf16.mxu0 0
    %2160 = vmatpush2.bf16.msra.mxu0 0
    %2161 = vmatprep.subr.bf16.mxu0 0
    %2162 = vmatpush2.bf16.msra.mxu0 0
    %2163 = vmatprep.subr.bf16.mxu0 0
    %2164 = vmatpush2.bf16.msra.mxu0 0
    %2165 = vmatprep.subr.bf16.mxu0 0
    %2166 = vmatpush2.bf16.msra.mxu0 0
    %2167 = vmatprep.mubr.bf16.mxu0 0
    %2168 = vmatmul.mubr.bf16.gmra.mxu0 %v2024
    %v2169 = vpop.f32.mrf.mxu0
    %v2170 = vadd.f32 %v2048, %v2169
    %v2171 = vpop.f32.mrf.mxu0
    %v2172 = vadd.f32 %v2052, %v2171
    %v2173 = vpop.f32.mrf.mxu0
    %v2174 = vadd.f32 %v2048, %v2173
    %v2175 = vpop.f32.mrf.mxu0
    %v2176 = vadd.f32 %v2052, %v2175
    %2177 = vdwg.mxu0
    %v2178 = vmul.f32 %v2170, %v2170
    %v2179 = vmul.f32 %v2172, %v2172
    %v2180 = vmul.f32 %v2174, %v2174
    %v2181 = vmul.f32 %v2176, %v2176
    %v2182 = vmul.f32 %v2170, %v2178
    %v2183 = vmul.f32 %v2172, %v2179
    %v2184 = vmul.f32 %v2174, %v2180
    %v2185 = vmul.f32 %v2176, %v2181
    %v2186 = vmul.f32 %v2182, 0.044715
    %v2187 = vmul.f32 %v2183, 0.044715
    %v2188 = vmul.f32 %v2184, 0.044715
    %v2189 = vmul.f32 %v2185, 0.044715
    %v2190 = vadd.f32 %v2170, %v2186
    %v2191 = vadd.f32 %v2172, %v2187
    %v2192 = vadd.f32 %v2174, %v2188
    %v2193 = vadd.f32 %v2176, %v2189
    %v2194 = vmul.f32 %v2190, 0.7978846
    %v2195 = vmul.f32 %v2191, 0.7978846
    %v2196 = vmul.f32 %v2192, 0.7978846
    %v2197 = vmul.f32 %v2193, 0.7978846
    %v2198 = vtanh.pop %v2194
    %v2199 = vtanh.pop %v2195
    %v2200 = vtanh.pop %v2196
    %v2201 = vtanh.pop %v2197
    %v2202 = vadd.f32 %v2198, 1.0
    %v2203 = vadd.f32 %v2199, 1.0
    %v2204 = vadd.f32 %v2200, 1.0
    %v2205 = vadd.f32 %v2201, 1.0
    %v2206 = vmul.f32 %v2202, 0.5
    %v2207 = vmul.f32 %v2203, 0.5
    %v2208 = vmul.f32 %v2204, 0.5
    %v2209 = vmul.f32 %v2205, 0.5
    %v2210 = vmul.f32 %v2170, %v2206
    %v2211 = vmul.f32 %v2172, %v2207
    %v2212 = vmul.f32 %v2174, %v2208
    %v2213 = vmul.f32 %v2176, %v2209
    %v2214 = vpack.c.bf16 %v2212, %v2210
    %v2215 = vpack.c.bf16 %v2213, %v2211
    %s2216 = scalar_lea.vmem [#allocation10], 128
    %v2217 = vld [vmem:[%s2216] sm:$0xf]
    %v2218 = vld [vmem:[%s2216 + $0x4] sm:$0xf]
    %v2219 = vld [vmem:[%s2216 + $0x8] sm:$0xf]
    %v2220 = vld [vmem:[%s2216 + $0xc] sm:$0xf]
    %v2221 = vld [vmem:[%s2216 + $0x10] sm:$0xf]
    %v2222 = vld [vmem:[%s2216 + $0x14] sm:$0xf]
    %v2223 = vld [vmem:[%s2216 + $0x18] sm:$0xf]
    %v2224 = vld [vmem:[%s2216 + $0x1c] sm:$0xf]
    %v2225 = vld [vmem:[%s2216 + $0x20] sm:$0xf]
    %v2226 = vld [vmem:[%s2216 + $0x24] sm:$0xf]
    %v2227 = vld [vmem:[%s2216 + $0x28] sm:$0xf]
    %v2228 = vld [vmem:[%s2216 + $0x2c] sm:$0xf]
    %v2229 = vld [vmem:[%s2216 + $0x30] sm:$0xf]
    %v2230 = vld [vmem:[%s2216 + $0x34] sm:$0xf]
    %v2231 = vld [vmem:[%s2216 + $0x38] sm:$0xf]
    %v2232 = vld [vmem:[%s2216 + $0x3c] sm:$0xf]
    %v2233 = vld [vmem:[%s2216 + $0x40] sm:$0xf]
    %v2234 = vld [vmem:[%s2216 + $0x44] sm:$0xf]
    %v2235 = vld [vmem:[%s2216 + $0x48] sm:$0xf]
    %v2236 = vld [vmem:[%s2216 + $0x4c] sm:$0xf]
    %v2237 = vld [vmem:[%s2216 + $0x50] sm:$0xf]
    %v2238 = vld [vmem:[%s2216 + $0x54] sm:$0xf]
    %v2239 = vld [vmem:[%s2216 + $0x58] sm:$0xf]
    %v2240 = vld [vmem:[%s2216 + $0x5c] sm:$0xf]
    %v2241 = vld [vmem:[%s2216 + $0x60] sm:$0xf]
    %v2242 = vld [vmem:[%s2216 + $0x64] sm:$0xf]
    %v2243 = vld [vmem:[%s2216 + $0x68] sm:$0xf]
    %v2244 = vld [vmem:[%s2216 + $0x6c] sm:$0xf]
    %v2245 = vld [vmem:[%s2216 + $0x70] sm:$0xf]
    %v2246 = vld [vmem:[%s2216 + $0x74] sm:$0xf]
    %v2247 = vld [vmem:[%s2216 + $0x78] sm:$0xf]
    %v2248 = vld [vmem:[%s2216 + $0x7c] sm:$0xf]
    %v2281 = vunpack.c.l.b16 %v2217
    %v2282 = vunpack.c.l.b16 %v2218
    %v2283 = vunpack.c.l.b16 %v2219
    %v2284 = vunpack.c.l.b16 %v2220
    %v2285 = vunpack.c.l.b16 %v2221
    %v2286 = vunpack.c.l.b16 %v2222
    %v2287 = vunpack.c.l.b16 %v2223
    %v2288 = vunpack.c.l.b16 %v2224
    %v2289 = vunpack.c.l.b16 %v2225
    %v2290 = vunpack.c.l.b16 %v2226
    %v2291 = vunpack.c.l.b16 %v2227
    %v2292 = vunpack.c.l.b16 %v2228
    %v2293 = vunpack.c.l.b16 %v2229
    %v2294 = vunpack.c.l.b16 %v2230
    %v2295 = vunpack.c.l.b16 %v2231
    %v2296 = vunpack.c.l.b16 %v2232
    %v2297 = vunpack.c.l.b16 %v2233
    %v2298 = vunpack.c.l.b16 %v2234
    %v2299 = vunpack.c.l.b16 %v2235
    %v2300 = vunpack.c.l.b16 %v2236
    %v2301 = vunpack.c.l.b16 %v2237
    %v2302 = vunpack.c.l.b16 %v2238
    %v2303 = vunpack.c.l.b16 %v2239
    %v2304 = vunpack.c.l.b16 %v2240
    %v2305 = vunpack.c.l.b16 %v2241
    %v2306 = vunpack.c.l.b16 %v2242
    %v2307 = vunpack.c.l.b16 %v2243
    %v2308 = vunpack.c.l.b16 %v2244
    %v2309 = vunpack.c.l.b16 %v2245
    %v2310 = vunpack.c.l.b16 %v2246
    %v2311 = vunpack.c.l.b16 %v2247
    %v2312 = vunpack.c.l.b16 %v2248
    %v2313 = vpack.c.b16 %v2282, %v2281
    %v2314 = vpack.c.b16 %v2284, %v2283
    %v2315 = vpack.c.b16 %v2286, %v2285
    %v2316 = vpack.c.b16 %v2288, %v2287
    %v2317 = vpack.c.b16 %v2290, %v2289
    %v2318 = vpack.c.b16 %v2292, %v2291
    %v2319 = vpack.c.b16 %v2294, %v2293
    %v2320 = vpack.c.b16 %v2296, %v2295
    %v2321 = vpack.c.b16 %v2298, %v2297
    %v2322 = vpack.c.b16 %v2300, %v2299
    %v2323 = vpack.c.b16 %v2302, %v2301
    %v2324 = vpack.c.b16 %v2304, %v2303
    %v2325 = vpack.c.b16 %v2306, %v2305
    %v2326 = vpack.c.b16 %v2308, %v2307
    %v2327 = vpack.c.b16 %v2310, %v2309
    %v2328 = vpack.c.b16 %v2312, %v2311
    %2345 = vmatprep.subr.bf16.mxu0 0
    %2346 = vmatpush1.bf16.msra.mxu0 %v2320
    %2347 = vmatprep.subr.bf16.mxu0 0
    %2348 = vmatpush1.bf16.msra.mxu0 %v2319
    %2349 = vmatprep.subr.bf16.mxu0 0
    %2350 = vmatpush1.bf16.msra.mxu0 %v2318
    %2351 = vmatprep.subr.bf16.mxu0 0
    %2352 = vmatpush1.bf16.msra.mxu0 %v2317
    %2353 = vmatprep.subr.bf16.mxu0 0
    %2354 = vmatpush1.bf16.msra.mxu0 %v2316
    %2355 = vmatprep.subr.bf16.mxu0 0
    %2356 = vmatpush1.bf16.msra.mxu0 %v2315
    %2357 = vmatprep.subr.bf16.mxu0 0
    %2358 = vmatpush1.bf16.msra.mxu0 %v2314
    %2359 = vmatprep.subr.bf16.mxu0 0
    %2360 = vmatpush1.bf16.msra.mxu0 %v2313
    %2361 = vmatprep.subr.bf16.mxu0 0
    %2362 = vmatpush2.bf16.msra.mxu0 %v2328
    %2363 = vmatprep.subr.bf16.mxu0 0
    %2364 = vmatpush2.bf16.msra.mxu0 %v2327
    %2365 = vmatprep.subr.bf16.mxu0 0
    %2366 = vmatpush2.bf16.msra.mxu0 %v2326
    %2367 = vmatprep.subr.bf16.mxu0 0
    %2368 = vmatpush2.bf16.msra.mxu0 %v2325
    %2369 = vmatprep.subr.bf16.mxu0 0
    %2370 = vmatpush2.bf16.msra.mxu0 %v2324
    %2371 = vmatprep.subr.bf16.mxu0 0
    %2372 = vmatpush2.bf16.msra.mxu0 %v2323
    %2373 = vmatprep.subr.bf16.mxu0 0
    %2374 = vmatpush2.bf16.msra.mxu0 %v2322
    %2375 = vmatprep.subr.bf16.mxu0 0
    %2376 = vmatpush2.bf16.msra.mxu0 %v2321
    %2377 = vmatprep.mubr.bf16.mxu0 %v2215
    %2378 = vmatmul.mubr.bf16.gmra.mxu0 %v2214
    %v2379 = vpop.f32.mrf.mxu0
    %v2380 = vadd.f32 0.0, %v2379
    %v2381 = vpop.f32.mrf.mxu0
    %v2382 = vpop.f32.mrf.mxu0
    %v2383 = vadd.f32 0.0, %v2382
    %v2384 = vpop.f32.mrf.mxu0
    %2385 = vdwg.mxu0
    %v2386 = vadd.f32 %v1976, %v2380
    %v2387 = vadd.f32 %v1977, %v2383
    %s2388 = scalar_lea.vmem %s14, 1
    %v2389 = vld [vmem:[%s2388] sm:$0x1]
    %v2391 = vlaneseq
    %v2392 = vshrl.u32 %v2391, 7
    %v2393 = vsub.s32 0, %v2392
    %v2394 = vrot.slane %v2389, %v2393
    %v2396 = vadd.f32 %v2386, %v2394
    %v2397 = vadd.f32 %v2387, %v2394
    %v2398 = vld [vmem:[%s15] sm:$0x1]
    %v2399 = vld [vmem:[%s16] sm:$0x1]
    %2400 = vadd.xlane.f32.xlu0 %v2396
    %v2401 = vpop.xlane.xlu0 %2400
    %2402 = vadd.xlane.f32.xlu0 %v2397
    %v2403 = vpop.xlane.xlu0 %2402
    %v2404 = vmul.f32 %v2401, %v174
    %v2405 = vmul.f32 %v2403, %v174
    %v2406 = vmul.f32 %v2396, %v2396
    %v2407 = vmul.f32 %v2397, %v2397
    %2408 = vadd.xlane.f32.xlu0 %v2406
    %v2409 = vpop.xlane.xlu0 %2408
    %2410 = vadd.xlane.f32.xlu0 %v2407
    %v2411 = vpop.xlane.xlu0 %2410
    %v2412 = vmul.f32 %v2409, %v174
    %v2413 = vmul.f32 %v2411, %v174
    %v2414 = vmul.f32 %v2404, %v2404
    %v2415 = vmul.f32 %v2405, %v2405
    %v2416 = vsub.f32 %v2412, %v2414
    %v2417 = vsub.f32 %v2413, %v2415
    %v2418 = vsub.f32 %v2396, %v2404
    %v2419 = vsub.f32 %v2397, %v2405
    %v2420 = vadd.f32 %v2416, 1e-05
    %v2421 = vadd.f32 %v2417, 1e-05
    %v2422 = vrsqrt.pop %v2420
    %v2423 = vrsqrt.pop %v2421
    %v2424 = vmul.f32 %v2418, %v2422
    %v2425 = vmul.f32 %v2419, %v2423
    %v2427 = vlaneseq
    %v2428 = vshrl.u32 %v2427, 7
    %v2429 = vsub.s32 0, %v2428
    %v2430 = vrot.slane %v2398, %v2429
    %v2432 = vmul.f32 %v2424, %v2430
    %v2433 = vmul.f32 %v2425, %v2430
    %v2435 = vlaneseq
    %v2436 = vshrl.u32 %v2435, 7
    %v2437 = vsub.s32 0, %v2436
    %v2438 = vrot.slane %v2399, %v2437
    %v2440 = vadd.f32 %v2432, %v2438
    %v2441 = vadd.f32 %v2433, %v2438
    %v2442 = vpack.c.bf16 %v2441, %v2440
    %v2443 = vld [vmem:[#allocation11] sm:$0xff]
    %v2444 = vld [vmem:[#allocation11 + $0x8] sm:$0xff]
    %v2445 = vld [vmem:[#allocation11 + $0x10] sm:$0xff]
    %v2446 = vld [vmem:[#allocation11 + $0x18] sm:$0xff]
    %v2447 = vld [vmem:[#allocation11 + $0x20] sm:$0xff]
    %v2448 = vld [vmem:[#allocation11 + $0x28] sm:$0xff]
    %v2449 = vld [vmem:[#allocation11 + $0x30] sm:$0xff]
    %v2450 = vld [vmem:[#allocation11 + $0x38] sm:$0xff]
    %v2451 = vld [vmem:[#allocation11 + $0x40] sm:$0xff]
    %v2452 = vld [vmem:[#allocation11 + $0x48] sm:$0xff]
    %v2453 = vld [vmem:[#allocation11 + $0x50] sm:$0xff]
    %v2454 = vld [vmem:[#allocation11 + $0x58] sm:$0xff]
    %v2455 = vld [vmem:[#allocation11 + $0x60] sm:$0xff]
    %v2456 = vld [vmem:[#allocation11 + $0x68] sm:$0xff]
    %v2457 = vld [vmem:[#allocation11 + $0x70] sm:$0xff]
    %v2458 = vld [vmem:[#allocation11 + $0x78] sm:$0xff]
    %v2459 = vld [vmem:[%s18] sm:$0x3]
    %v2461 = vlaneseq
    %v2462 = vshrl.u32 %v2461, 7
    %v2463 = vsub.s32 0, %v2462
    %v2464 = vrot.slane %v2459, %v2463
    %v2465 = vlaneseq
    %v2466 = vshrl.u32 %v2465, 7
    %v2467 = vsub.s32 1, %v2466
    %v2468 = vrot.slane %v2459, %v2467
    %v2487 = vunpack.c.l.b16 %v2443
    %v2488 = vunpack.c.h.b16 %v2443
    %v2489 = vunpack.c.l.b16 %v2444
    %v2490 = vunpack.c.h.b16 %v2444
    %v2491 = vunpack.c.l.b16 %v2445
    %v2492 = vunpack.c.h.b16 %v2445
    %v2493 = vunpack.c.l.b16 %v2446
    %v2494 = vunpack.c.h.b16 %v2446
    %v2495 = vunpack.c.l.b16 %v2447
    %v2496 = vunpack.c.h.b16 %v2447
    %v2497 = vunpack.c.l.b16 %v2448
    %v2498 = vunpack.c.h.b16 %v2448
    %v2499 = vunpack.c.l.b16 %v2449
    %v2500 = vunpack.c.h.b16 %v2449
    %v2501 = vunpack.c.l.b16 %v2450
    %v2502 = vunpack.c.h.b16 %v2450
    %v2503 = vunpack.c.l.b16 %v2451
    %v2504 = vunpack.c.h.b16 %v2451
    %v2505 = vunpack.c.l.b16 %v2452
    %v2506 = vunpack.c.h.b16 %v2452
    %v2507 = vunpack.c.l.b16 %v2453
    %v2508 = vunpack.c.h.b16 %v2453
    %v2509 = vunpack.c.l.b16 %v2454
    %v2510 = vunpack.c.h.b16 %v2454
    %v2511 = vunpack.c.l.b16 %v2455
    %v2512 = vunpack.c.h.b16 %v2455
    %v2513 = vunpack.c.l.b16 %v2456
    %v2514 = vunpack.c.h.b16 %v2456
    %v2515 = vunpack.c.l.b16 %v2457
    %v2516 = vunpack.c.h.b16 %v2457
    %v2517 = vunpack.c.l.b16 %v2458
    %v2518 = vunpack.c.h.b16 %v2458
    %v2519 = vpack.c.b16 %v2489, %v2487
    %v2520 = vpack.c.b16 %v2490, %v2488
    %v2521 = vpack.c.b16 %v2493, %v2491
    %v2522 = vpack.c.b16 %v2494, %v2492
    %v2523 = vpack.c.b16 %v2497, %v2495
    %v2524 = vpack.c.b16 %v2498, %v2496
    %v2525 = vpack.c.b16 %v2501, %v2499
    %v2526 = vpack.c.b16 %v2502, %v2500
    %v2527 = vpack.c.b16 %v2505, %v2503
    %v2528 = vpack.c.b16 %v2506, %v2504
    %v2529 = vpack.c.b16 %v2509, %v2507
    %v2530 = vpack.c.b16 %v2510, %v2508
    %v2531 = vpack.c.b16 %v2513, %v2511
    %v2532 = vpack.c.b16 %v2514, %v2512
    %v2533 = vpack.c.b16 %v2517, %v2515
    %v2534 = vpack.c.b16 %v2518, %v2516
    %2551 = vmatprep.subr.bf16.mxu0 %v2534
    %2552 = vmatpush1.bf16.msra.mxu0 %v2533
    %2553 = vmatprep.subr.bf16.mxu0 %v2532
    %2554 = vmatpush1.bf16.msra.mxu0 %v2531
    %2555 = vmatprep.subr.bf16.mxu0 %v2530
    %2556 = vmatpush1.bf16.msra.mxu0 %v2529
    %2557 = vmatprep.subr.bf16.mxu0 %v2528
    %2558 = vmatpush1.bf16.msra.mxu0 %v2527
    %2559 = vmatprep.subr.bf16.mxu0 %v2526
    %2560 = vmatpush1.bf16.msra.mxu0 %v2525
    %2561 = vmatprep.subr.bf16.mxu0 %v2524
    %2562 = vmatpush1.bf16.msra.mxu0 %v2523
    %2563 = vmatprep.subr.bf16.mxu0 %v2522
    %2564 = vmatpush1.bf16.msra.mxu0 %v2521
    %2565 = vmatprep.subr.bf16.mxu0 %v2520
    %2566 = vmatpush1.bf16.msra.mxu0 %v2519
    %2567 = vmatprep.subr.bf16.mxu0 0
    %2568 = vmatpush2.bf16.msra.mxu0 0
    %2569 = vmatprep.subr.bf16.mxu0 0
    %2570 = vmatpush2.bf16.msra.mxu0 0
    %2571 = vmatprep.subr.bf16.mxu0 0
    %2572 = vmatpush2.bf16.msra.mxu0 0
    %2573 = vmatprep.subr.bf16.mxu0 0
    %2574 = vmatpush2.bf16.msra.mxu0 0
    %2575 = vmatprep.subr.bf16.mxu0 0
    %2576 = vmatpush2.bf16.msra.mxu0 0
    %2577 = vmatprep.subr.bf16.mxu0 0
    %2578 = vmatpush2.bf16.msra.mxu0 0
    %2579 = vmatprep.subr.bf16.mxu0 0
    %2580 = vmatpush2.bf16.msra.mxu0 0
    %2581 = vmatprep.subr.bf16.mxu0 0
    %2582 = vmatpush2.bf16.msra.mxu0 0
    %2583 = vmatprep.mubr.bf16.mxu0 0
    %2584 = vmatmul.mubr.bf16.gmra.mxu0 %v2442
    %v2585 = vpop.f32.mrf.mxu0
    %v2586 = vadd.f32 %v2464, %v2585
    %v2587 = vpop.f32.mrf.mxu0
    %v2588 = vadd.f32 %v2468, %v2587
    %v2589 = vpop.f32.mrf.mxu0
    %v2590 = vadd.f32 %v2464, %v2589
    %v2591 = vpop.f32.mrf.mxu0
    %v2592 = vadd.f32 %v2468, %v2591
    %2593 = vdwg.mxu0
    %2594 = vst [vmem:[#allocation13] sm:$0xff] %v2586
    %2595 = vst [vmem:[#allocation13 + $0x8] sm:$0xff] %v2588
    %2596 = vst [vmem:[#allocation13 + $0x10] sm:$0xff] %v2590
    %2597 = vst [vmem:[#allocation13 + $0x18] sm:$0xff] %v2592
    // Predicated region
    $region102: #{forward.1} parent=1 // pred_check
      _
    $region103: #{forward.1} parent=1 // pred_check_branch
      %2599 = sbr.rel (0) target = $region105
    $region104: #{forward.1} parent=1 // pred_region
      %s2601 = ssub.s32 512, 512
      %2602 = vsyncadd [#allocation4], %s2601
      %s2603 = sshll.u32 [#allocation13], 4
      %s2604 = int_to_ptr.vmem [resolvable:$true] %s2603
      %2609 = dma.vmem_to_hbm [thread:$0]  %s2604, 512, %s19, [#allocation4], 256, 256, 16
    $region105: #{forward.1} parent=1 // pred_fallthru
      _
    // Predicated region
    $region106: #{forward.1} parent=1 // pred_check
      _
    $region107: #{forward.1} parent=1 // pred_check_branch
      %2611 = sbr.rel (0) target = $region109
    $region108: #{forward.1} parent=1 // pred_region
      %2612 = dma.done [#allocation4], 512
    $region109: #{forward.1} parent=1 // pred_fallthru
      _
    %2613 = vsyncpa [#allocation3], 1
    %2614 = vsyncpa [#allocation6], 1
    %2615 = vsyncpa [#allocation9], 1
    %2616 = vsyncpa [#allocation12], 1
    %2617 = vsyncpa [#allocation4], 1

</llo_original>
